<compile_context>
chip_gen: v5e
topology: v5e:2x2
jax: 0.10.0
libtpu: 0.0.40
codegen_flags: <defaults>
</compile_context>

<pallas_src>
import functools

import jax
import jax.numpy as jnp
from jax.experimental import pallas as pl
from jax.experimental.pallas import tpu as pltpu

BS = 512        # channels per group        (module: self.bs)
HIDDEN = 32     # bottleneck width          (module: self.hidden_bs)
LANE = 128      # TPU vreg lane width

# VMEM sizing.  Pipeline keeps in+out blocks double-buffered plus ~1-2
# block-sized temps, so budgets below keep every path under the explicit
# 48 MiB scoped-VMEM limit (v7x physical VMEM is 64 MiB; v5e/v6e have 128 MiB
# but only a 16/32 MiB *default* scoped limit, hence the explicit override).
_VMEM_LIMIT_BYTES = 48 * 1024 * 1024
_PLAIN_BLOCK_BUDGET = 8 * 1024 * 1024    # ~5 block-sized buffers  -> ~40 MiB
_PACKED_BLOCK_BUDGET = 5 * 1024 * 1024   # ~6-7 block-sized buffers -> ~35 MiB
_TWO_PASS_HW_TILE = 2048                 # spatial tile (lanes) in two-pass path
_FUSED_MAX_SLAB_BYTES = 8 * 1024 * 1024  # one (512, HW) slab above this -> two-pass


def _compiler_params(dim_sem):
    return pltpu.CompilerParams(dimension_semantics=dim_sem,
                                vmem_limit_bytes=_VMEM_LIMIT_BYTES)


def _pick_block_rows(n, bytes_per_row, budget):
    """How many flattened (batch*group) slabs to process per grid step."""
    cap = max(1, budget // bytes_per_row)
    # Keep >= 4 grid steps when possible: after megacore sharding (v7x: 2 TCs
    # per chip) every core still has >= 2 steps, so DMA stays double-buffered
    # per core instead of fully exposed.
    if n >= 4:
        cap = min(cap, n // 4)
    elif n >= 2:
        cap = min(cap, n // 2)
    return max(1, min(cap, n))


def _cost_estimate(n, hw, itemsize, passes=2):
    # Purely memory-bound: reads/writes of x dominate.
    return pl.CostEstimate(
        flops=2 * n * BS * hw + 4 * n * BS * HIDDEN,
        transcendentals=n * BS,
        bytes_accessed=passes * n * BS * hw * itemsize + 2 * BS * HIDDEN * 4,
    )


# --------------------------------------------------------------------------
# Path 1: plain layout (TN, 512, HW).  Lane-dense whenever HW % 128 == 0;
# also the correct (masked) fallback for arbitrary HW that fits VMEM.
# --------------------------------------------------------------------------
def _bcpa_kernel_plain(x_ref, w1_ref, w2_ref, o_ref):
    # x_ref/o_ref: (TN, 512, HW); w1_ref: (32, 512); w2_ref: (512, 32).
    hw = x_ref.shape[-1]
    # AdaptiveAvgPool2d(1): lane-axis reduction with f32 accumulation (no f32
    # copy of the big block is materialized).
    avg = jnp.sum(x_ref[...], axis=-1, dtype=jnp.float32) * (1.0 / hw)   # (TN, 512)
    h = jax.lax.dot_general(avg, w1_ref[...], (((1,), (1,)), ((), ())),
                            preferred_element_type=jnp.float32)          # (TN, 32)
    h = jnp.maximum(h, 0.0)
    z = jax.lax.dot_general(h, w2_ref[...], (((1,), (1,)), ((), ())),
                            preferred_element_type=jnp.float32)          # (TN, 512)
    res = 1.0 / (1.0 + jnp.exp(z))                    # == 1 - sigmoid(z)
    # Re-read the ref and multiply in the input dtype.
    o_ref[...] = x_ref[...] * res.astype(o_ref.dtype)[:, :, None]


def _run_plain(x, w1, w2, n, hw, *, donate_x=True, block_rows=None):
    b, c, h, w = x.shape
    x3 = x.reshape(n, BS, hw)
    itemsize = jnp.dtype(x.dtype).itemsize
    tn = block_rows or _pick_block_rows(n, BS * hw * itemsize,
                                        _PLAIN_BLOCK_BUDGET)
    out = pl.pallas_call(
        _bcpa_kernel_plain,
        out_shape=jax.ShapeDtypeStruct((n, BS, hw), x.dtype),
        grid=(pl.cdiv(n, tn),),                       # ragged final block OK
        in_specs=[
            pl.BlockSpec((tn, BS, hw), lambda i: (i, 0, 0)),
            pl.BlockSpec((HIDDEN, BS), lambda i: (0, 0)),
            pl.BlockSpec((BS, HIDDEN), lambda i: (0, 0)),
        ],
        out_specs=pl.BlockSpec((tn, BS, hw), lambda i: (i, 0, 0)),
        input_output_aliases={0: 0} if donate_x else {},
        cost_estimate=_cost_estimate(n, hw, itemsize),
        compiler_params=_compiler_params(("parallel",)),
    )(x3, w1, w2)
    return out.reshape(b, c, h, w)


# --------------------------------------------------------------------------
# Path 2: packed layout (TN, R, 128) for small feature maps (HW | 128,
# 16 <= HW < 128).  Each 128-lane row holds K = 128 // HW channels; channel
# c = row*K + lane // HW.  Loads and the output store are fully lane-dense.
# --------------------------------------------------------------------------
def _bcpa_kernel_packed(x_ref, w1p_ref, w2p_ref, e_ref, o_ref, *, hw):
    # x_ref/o_ref: (TN, R, 128) packed view of (TN, 512, HW).
    # w1p_ref: (K, R, 32)  with w1p[j, r, m] = w1[m, r*K + j]
    # w2p_ref: (K, 32, R)  with w2p[j, m, r] = w2[r*K + j, m]
    # e_ref:   (K, 128)    with e[j, l] = (l // hw == j), float32
    k = LANE // hw
    tn, r, _ = x_ref.shape
    inv_hw = 1.0 / hw

    # (1) AdaptiveAvgPool2d(1) as split-lane reductions with f32 accumulation.
    pooled = [
        jnp.sum(x_ref[:, :, pl.ds(j * hw, hw)], axis=-1, dtype=jnp.float32)
        * inv_hw
        for j in range(k)
    ]

    # (2) fc[0] (512->32) + ReLU, fc[2] (32->512) + (1 - sigmoid); all tiny
    #     MXU dots, results collected into a compact (TN, R, K) tensor.
    h = jnp.zeros((tn, HIDDEN), jnp.float32)
    for j in range(k):
        h = h + jnp.dot(pooled[j], w1p_ref[j],
                        preferred_element_type=jnp.float32)
    h = jnp.maximum(h, 0.0)                                              # (TN, 32)

    lane_k = jax.lax.broadcasted_iota(jnp.int32, (1, 1, k), 2)
    res3 = jnp.zeros((tn, r, k), jnp.float32)
    for j in range(k):
        z_j = jnp.dot(h, w2p_ref[j], preferred_element_type=jnp.float32)  # (TN, R)
        res_j = 1.0 / (1.0 + jnp.exp(z_j))            # == 1 - sigmoid(z_j)
        res3 = jnp.where(lane_k == j, res_j[:, :, None], res3)

    # (3) Expand compact scales to the flat lane layout on the (otherwise
    #     idle) MXU: scale[t, r, l] = sum_j res3[t, r, j] * E[j, l].
    e3 = jnp.broadcast_to(e_ref[...], (tn, k, LANE))                      # f32
    scale = jnp.einsum("trk,tkl->trl", res3, e3,
                       preferred_element_type=jnp.float32)                # (TN, R, 128)

    # (4) single unmasked, lane-dense store; multiply in the input dtype.
    o_ref[...] = x_ref[...] * scale.astype(o_ref.dtype)


def _run_packed(x, w1, w2, n, hw, *, donate_x=True, block_rows=None):
    b, c, h, w = x.shape
    k = LANE // hw
    r = BS // k                        # rows per (batch, group) slab
    xp = x.reshape(n, r, LANE)         # free view of the contiguous slabs
    # Re-pack the 1x1-conv weights per lane-group (tiny, done once outside).
    w1p = jnp.transpose(w1.T.reshape(r, k, HIDDEN), (1, 0, 2))   # (K, R, 32)
    w2p = jnp.transpose(w2.reshape(r, k, HIDDEN), (1, 2, 0))     # (K, 32, R)
    # Constant channel->lane expansion matrix.
    e = (jnp.arange(LANE)[None, :] // hw
         == jnp.arange(k)[:, None]).astype(jnp.float32)          # (K, 128)
    itemsize = jnp.dtype(x.dtype).itemsize
    tn = block_rows or _pick_block_rows(n, BS * hw * itemsize,
                                        _PACKED_BLOCK_BUDGET)
    out = pl.pallas_call(
        functools.partial(_bcpa_kernel_packed, hw=hw),
        out_shape=jax.ShapeDtypeStruct((n, r, LANE), x.dtype),
        grid=(pl.cdiv(n, tn),),
        in_specs=[
            pl.BlockSpec((tn, r, LANE), lambda i: (i, 0, 0)),
            pl.BlockSpec((k, r, HIDDEN), lambda i: (0, 0, 0)),
            pl.BlockSpec((k, HIDDEN, r), lambda i: (0, 0, 0)),
            pl.BlockSpec((k, LANE), lambda i: (0, 0)),
        ],
        out_specs=pl.BlockSpec((tn, r, LANE), lambda i: (i, 0, 0)),
        input_output_aliases={0: 0} if donate_x else {},
        cost_estimate=_cost_estimate(n, hw, itemsize),
        compiler_params=_compiler_params(("parallel",)),
    )(xp, w1p, w2p, e)
    return out.reshape(b, c, h, w)


# --------------------------------------------------------------------------
# Path 3: very large feature maps -- a single (512, HW) slab would blow the
# per-block VMEM budget (e.g. 112x112 f32 ~ 25 MiB; impossible on v7x's
# 64 MiB physical VMEM once double-buffered).  Two passes: pooled-sum kernel
# (HW tiled on an 'arbitrary' reduction axis), tiny excitation in plain JAX,
# then a lane-dense elementwise rescale kernel.
# --------------------------------------------------------------------------
def _pool_sum_kernel(x_ref, psum_ref, *, hw):
    # x_ref: (1, 512, THW); psum_ref: (1, 512, 1) f32, accumulated over axis 1
    # of the grid (spatial tiles).
    j = pl.program_id(1)
    njt = pl.num_programs(1)
    thw = x_ref.shape[-1]

    @pl.when(j == 0)
    def _():
        psum_ref[...] = jnp.zeros_like(psum_ref)

    @pl.when(j < njt - 1)
    def _():
        psum_ref[...] += jnp.sum(x_ref[...], axis=-1, keepdims=True,
                                 dtype=jnp.float32)

    @pl.when(j == njt - 1)
    def _():
        # Ragged final spatial tile: mask out-of-range columns before reducing.
        col = jax.lax.broadcasted_iota(jnp.int32, (1, 1, thw), 2)
        xm = jnp.where(col < hw - j * thw, x_ref[...], 0)
        psum_ref[...] += jnp.sum(xm, axis=-1, keepdims=True,
                                 dtype=jnp.float32)


def _scale_mul_kernel(x_ref, res_ref, o_ref):
    # x_ref/o_ref: (1, 512, THW); res_ref: (1, 512, 1) in x dtype.
    o_ref[...] = x_ref[...] * res_ref[...]


def _run_two_pass(x, w1, w2, n, hw, *, donate_x=True):
    b, c, h, w = x.shape
    x3 = x.reshape(n, BS, hw)
    itemsize = jnp.dtype(x.dtype).itemsize
    thw = min(_TWO_PASS_HW_TILE, ((hw + LANE - 1) // LANE) * LANE)
    grid = (n, pl.cdiv(hw, thw))

    psum = pl.pallas_call(
        functools.partial(_pool_sum_kernel, hw=hw),
        out_shape=jax.ShapeDtypeStruct((n, BS, 1), jnp.float32),
        grid=grid,
        in_specs=[pl.BlockSpec((1, BS, thw), lambda i, j: (i, 0, j))],
        out_specs=pl.BlockSpec((1, BS, 1), lambda i, j: (i, 0, 0)),
        cost_estimate=_cost_estimate(n, hw, itemsize, passes=1),
        compiler_params=_compiler_params(("parallel", "arbitrary")),
    )(x3)

    # Tiny 512->32->512 excitation on pooled means: negligible vs. |x|.
    pooled = psum[:, :, 0] * (1.0 / hw)                           # (N, 512) f32
    hmid = jnp.maximum(pooled @ w1.T, 0.0)                        # (N, 32)
    res = 1.0 / (1.0 + jnp.exp(hmid @ w2.T))                      # == 1 - sigmoid
    res3 = res.astype(x.dtype)[:, :, None]                        # (N, 512, 1)

    out = pl.pallas_call(
        _scale_mul_kernel,
        out_shape=jax.ShapeDtypeStruct((n, BS, hw), x.dtype),
        grid=grid,
        in_specs=[
            pl.BlockSpec((1, BS, thw), lambda i, j: (i, 0, j)),
            pl.BlockSpec((1, BS, 1), lambda i, j: (i, 0, 0)),
        ],
        out_specs=pl.BlockSpec((1, BS, thw), lambda i, j: (i, 0, j)),
        input_output_aliases={0: 0} if donate_x else {},
        cost_estimate=_cost_estimate(n, hw, itemsize),
        compiler_params=_compiler_params(("parallel", "parallel")),
    )(x3, res3)
    return out.reshape(b, c, h, w)


# --------------------------------------------------------------------------
# Public wrapper
# --------------------------------------------------------------------------
def batch_channel_perturbe_attention(x, w1, w2, *, donate_x=True):
    """Fused forward of BatchChannelPreturbeAttention.

    x:  (B, C, H, W), C % 512 == 0
    w1: (32, 512)  fc[0] = Conv2d(512 -> 32, 1x1, bias=False) weights
    w2: (512, 32)  fc[2] = Conv2d(32 -> 512, 1x1, bias=False) weights

    When donate_x=True (default), the result is written into x's HBM buffer
    (input_output_aliases) -- the caller must NOT reuse x afterwards.
    """
    b, c, h, w = x.shape
    assert c % BS == 0, "channel dim must be a multiple of 512"
    assert w1.shape == (HIDDEN, BS) and w2.shape == (BS, HIDDEN)
    n = b * (c // BS)
    hw = h * w
    itemsize = jnp.dtype(x.dtype).itemsize
    if BS * hw * itemsize > _FUSED_MAX_SLAB_BYTES:
        # Huge feature maps: split into pooled-sum + rescale passes.
        return _run_two_pass(x, w1, w2, n, hw, donate_x=donate_x)
    if hw < LANE and LANE % hw == 0 and hw >= 16:
        # Small feature maps: pack 128 // HW channels per 128-lane row so both
        # the loads and the output store stay lane-dense (unmasked vst).
        return _run_packed(x, w1, w2, n, hw, donate_x=donate_x)
    # HW % 128 == 0 -> naturally lane-dense.  Other HW (e.g. 7x7=49, 14x14=196)
    # use a full-extent (masked) last dim: correct, just not lane-dense.
    # TODO(synk): lane-dense fused path for HW like 49/196/784 via periodic
    # channel->lane expansion matrices over the flat (N, 4*HW, 128) view.
    # TODO(synk): route hw in {1, 2, 4, 8} through a K-loop-free packed kernel;
    # absolute byte counts there are tiny so the masked fallback is acceptable.
    return _run_plain(x, w1, w2, n, hw, donate_x=donate_x)


def _reference(x, w1, w2):
    """Pure-JAX replica of the PyTorch forward, for correctness checks."""
    b, c, h, w = x.shape
    g = c // BS
    xg = x.reshape(b, g, BS, h * w).astype(jnp.float32)
    avg = jnp.mean(xg, axis=-1)                                   # (B, G, 512)
    hid = jnp.maximum(jnp.einsum("bgc,mc->bgm", avg, w1), 0.0)    # (B, G, 32)
    sig = jax.nn.sigmoid(jnp.einsum("bgm,cm->bgc", hid, w2))      # (B, G, 512)
    res = (1.0 - sig).reshape(b, c)
    return x * res[:, :, None, None].astype(x.dtype)


def _check(name, out, ref, tol=5e-4):
    assert out.shape == ref.shape
    err = float(jnp.max(jnp.abs(out - ref)))
    assert err < tol, f"{name} mismatch vs reference: {err}"


if __name__ == "__main__":
    key = jax.random.PRNGKey(0)
    ka, kb, kc, kd, kw1, kw2 = jax.random.split(key, 6)

    # Conv2d default init (kaiming-uniform bound = 1/sqrt(fan_in), no bias).
    b1 = 1.0 / (BS ** 0.5)
    b2 = 1.0 / (HIDDEN ** 0.5)
    w1 = jax.random.uniform(kw1, (HIDDEN, BS), jnp.float32, -b1, b1)
    w2 = jax.random.uniform(kw2, (BS, HIDDEN), jnp.float32, -b2, b2)

    # Case 1: H*W = 256 (multiple of 128), 2 channel groups -> plain path.
    xa = jax.random.normal(ka, (2, 1024, 16, 16), dtype=jnp.float32)
    refa = jax.block_until_ready(_reference(xa, w1, w2))
    outa = jax.block_until_ready(batch_channel_perturbe_attention(xa, w1, w2))
    _check("plain path", outa, refa)

    # Case 2: H*W = 64 (< 128) -> packed lane-dense path (K = 2).
    xb = jax.random.normal(kb, (2, 512, 8, 8), dtype=jnp.float32)
    refb = jax.block_until_ready(_reference(xb, w1, w2))
    outb = jax.block_until_ready(batch_channel_perturbe_attention(xb, w1, w2))
    _check("packed path", outb, refb)

    # Case 3: ragged grid (n=3, block_rows=2 -> cdiv grid with masked tail).
    xc = jax.random.normal(kc, (3, 512, 16, 16), dtype=jnp.float32)
    refc = jax.block_until_ready(_reference(xc, w1, w2))
    outc = jax.block_until_ready(
        _run_plain(xc, w1, w2, 3, 256, block_rows=2).block_until_ready())
    _check("ragged-grid path", outc, refc)

    # Case 4: H*W = 4608 -> slab > 8 MiB -> two-pass pooled/rescale path
    # (also exercises the ragged spatial tile: 4608 = 2048 + 2048 + 512).
    xd = jax.random.normal(kd, (1, 512, 48, 96), dtype=jnp.float32)
    refd = jax.block_until_ready(_reference(xd, w1, w2))
    outd = jax.block_until_ready(batch_channel_perturbe_attention(xd, w1, w2))
    _check("two-pass path", outd, refd)

    print("KERNEL_OK")
</pallas_src>

<mosaic_0001>
module attributes {stable_mosaic.version = 11 : i64} {
  func.func @_bcpa_kernel_plain(%arg0: i32, %arg1: memref<1x512x256xf32, #tpu.memory_space<vmem>>, %arg2: memref<32x512xf32, #tpu.memory_space<vmem>>, %arg3: memref<512x32xf32, #tpu.memory_space<vmem>>, %arg4: memref<1x512x256xf32, #tpu.memory_space<vmem>>) attributes {dimension_semantics = [#tpu.dimension_semantics<parallel>], iteration_bounds = array<i64: 4>, scalar_prefetch = 0 : i64, scratch_operands = 0 : i64, tpu.core_type = #tpu.core_type<tc>, window_params = [{transform_indices = @transform_0, window_bounds = array<i64: 1, 512, 256>}, {pipeline_mode = #tpu.pipeline_mode<synchronous>, transform_indices = @transform_1, window_bounds = array<i64: 32, 512>}, {pipeline_mode = #tpu.pipeline_mode<synchronous>, transform_indices = @transform_2, window_bounds = array<i64: 512, 32>}, {transform_indices = @transform_3, window_bounds = array<i64: 1, 512, 256>}]} {
    %c0 = arith.constant 0 : index
    %c0_0 = arith.constant 0 : index
    %c0_1 = arith.constant 0 : index
    %0 = vector.load %arg1[%c0, %c0_0, %c0_1] : memref<1x512x256xf32, #tpu.memory_space<vmem>>, vector<1x512x256xf32>
    %cst = arith.constant dense<0.000000e+00> : vector<1x512xf32>
    %1 = vector.multi_reduction <add>, %0, %cst [2] : vector<1x512x256xf32> to vector<1x512xf32>
    %cst_2 = arith.constant 3.906250e-03 : f32
    %2 = vector.broadcast %cst_2 : f32 to vector<1x512xf32>
    %3 = arith.mulf %1, %2 : vector<1x512xf32>
    %c0_3 = arith.constant 0 : index
    %c0_4 = arith.constant 0 : index
    %4 = vector.load %arg2[%c0_3, %c0_4] : memref<32x512xf32, #tpu.memory_space<vmem>>, vector<32x512xf32>
    %cst_5 = arith.constant dense<0.000000e+00> : vector<1x32xf32>
    %5 = tpu.matmul %3, %4, %cst_5 {dimension_numbers = #tpu.dot_dimension_numbers<[1], [1], [0], [0], [0, 0, 1, 0], [], []>} : vector<1x512xf32>, vector<32x512xf32>, vector<1x32xf32> -> vector<1x32xf32>
    %cst_6 = arith.constant 0.000000e+00 : f32
    %6 = vector.broadcast %cst_6 : f32 to vector<1x32xf32>
    %7 = arith.maximumf %5, %6 : vector<1x32xf32>
    %c0_7 = arith.constant 0 : index
    %c0_8 = arith.constant 0 : index
    %8 = vector.load %arg3[%c0_7, %c0_8] : memref<512x32xf32, #tpu.memory_space<vmem>>, vector<512x32xf32>
    %cst_9 = arith.constant dense<0.000000e+00> : vector<1x512xf32>
    %9 = tpu.matmul %7, %8, %cst_9 {dimension_numbers = #tpu.dot_dimension_numbers<[1], [1], [0], [0], [0, 0, 1, 0], [], []>} : vector<1x32xf32>, vector<512x32xf32>, vector<1x512xf32> -> vector<1x512xf32>
    %10 = math.exp %9 : vector<1x512xf32>
    %cst_10 = arith.constant 1.000000e+00 : f32
    %11 = vector.broadcast %cst_10 : f32 to vector<1x512xf32>
    %12 = arith.addf %11, %10 : vector<1x512xf32>
    %cst_11 = arith.constant 1.000000e+00 : f32
    %13 = vector.broadcast %cst_11 : f32 to vector<1x512xf32>
    %14 = arith.divf %13, %12 : vector<1x512xf32>
    %c0_12 = arith.constant 0 : index
    %c0_13 = arith.constant 0 : index
    %c0_14 = arith.constant 0 : index
    %15 = vector.load %arg1[%c0_12, %c0_13, %c0_14] : memref<1x512x256xf32, #tpu.memory_space<vmem>>, vector<1x512x256xf32>
    %16 = vector.shape_cast %14 : vector<1x512xf32> to vector<1x512x1xf32>
    %17 = vector.broadcast %16 : vector<1x512x1xf32> to vector<1x512x256xf32>
    %18 = arith.mulf %15, %17 : vector<1x512x256xf32>
    %c0_15 = arith.constant 0 : index
    %c0_16 = arith.constant 0 : index
    %c0_17 = arith.constant 0 : index
    %19 = vector.load %arg4[%c0_15, %c0_16, %c0_17] : memref<1x512x256xf32, #tpu.memory_space<vmem>>, vector<1x512x256xf32>
    tpu.vector_store %arg4[%c0_15, %c0_16, %c0_17], %18 {strides = array<i32>} : memref<1x512x256xf32, #tpu.memory_space<vmem>>, vector<1x512x256xf32>,
    return
  }
  func.func @transform_0(%arg0: i32) -> (i32, i32, i32) {
    %c0_i32 = arith.constant 0 : i32
    %c0_i32_0 = arith.constant 0 : i32
    %c0_i32_1 = arith.constant 0 : i32
    return %arg0, %c0_i32, %c0_i32_0 : i32, i32, i32
  }
  func.func @transform_1(%arg0: i32) -> (i32, i32) {
    %c0_i32 = arith.constant 0 : i32
    %c0_i32_0 = arith.constant 0 : i32
    %c0_i32_1 = arith.constant 0 : i32
    return %c0_i32, %c0_i32_0 : i32, i32
  }
  func.func @transform_2(%arg0: i32) -> (i32, i32) {
    %c0_i32 = arith.constant 0 : i32
    %c0_i32_0 = arith.constant 0 : i32
    %c0_i32_1 = arith.constant 0 : i32
    return %c0_i32, %c0_i32_0 : i32, i32
  }
  func.func @transform_3(%arg0: i32) -> (i32, i32, i32) {
    %c0_i32 = arith.constant 0 : i32
    %c0_i32_0 = arith.constant 0 : i32
    %c0_i32_1 = arith.constant 0 : i32
    return %arg0, %c0_i32, %c0_i32_0 : i32, i32, i32
  }
}

</mosaic_0001>

<llo_original>
// kernel: tpu_custom_call.1
$region0: #{tpu_custom_call.1}
  #allocation0 [shape = 'u32[]', space=smem, size = 0x4, offset = 0x4, fixed_abs, tag = 'smem constant byte address 0x4 - core index']
  #allocation1 [shape = 'u32[72,128]{1,0:T(1,128)}', space=vmem, size = 0x9000, scoped, tag = 'internal scratch']
  %s0 = inlined_call_operand.hbm [shape: f32[4,512,256], index: 0, kind: input, shape index: {}, may-alias: {0,3}]
  %s1 = inlined_call_operand.vmem [shape: f32[32,512], index: 1, kind: input, shape index: {}]
  %s2 = inlined_call_operand.vmem [shape: f32[512,32], index: 2, kind: input, shape index: {}]
  %s3 = inlined_call_operand.hbm [shape: f32[4,512,256], index: 3, kind: output, shape index: {}, may-alias: {0,3}]
  %s4 = sld [smem:[#allocation0]]
  $region49: #{tpu_custom_call.1} parent=0
    _
  %s6 = ssub.s32 1, %s4
  %s7 = scalar_select 0, %s6, %s4
  $region1: #{tpu_custom_call.1} parent=0
    #allocation2 [shape = 'u8[1048576]{0}', space=vmem, size = 0x100000, scoped, tag = 'input window, operand 0']
    #allocation3 [shape = 's32[2]{0}', space=sflag, size = 0x8, scoped, tag = 'scoped memory for tpu_custom_call.1']
    #allocation4 [shape = 's32[2]{0}', space=sflag, size = 0x8, scoped, tag = 'scoped memory for tpu_custom_call.1']
    #allocation5 [shape = 'u8[1048576]{0}', space=vmem, size = 0x100000, scoped, tag = 'output window, operand 0']
    %8 = vsyncpa [#allocation3], 0
    %s9 = scalar_lea.sflag [#allocation3], 1
    %10 = vsyncpa %s9, 0
    %11 = vsyncpa [#allocation4], 0
    %s12 = scalar_lea.sflag [#allocation4], 1
    %13 = vsyncpa %s12, 0
    loop: start=0, step=1, limit=6
    $region2: #{tpu_custom_call.1} parent=1 // loop_pre_header
      _
    $region3: #{tpu_custom_call.1} parent=1 // loop_header
      %s15 = sphi 0, %s19
      %p16 = scmp.ge.s32.totalorder %s15, 6
      %s25 = sphi 0, %s27
      %s28 = sphi 0, %s25
      %s29 = sphi 0, %s28
      %s45 = sphi 0, %s29
      %s49 = sphi 0, %s49
      %s51 = sphi 0, %s49
      %s52 = sphi 0, %s51
      %s66 = sphi 0, %s52
      %s70 = sphi 0, %s70
      %s72 = sphi 0, %s70
      %s73 = sphi 0, %s72
      %s87 = sphi 0, %s73
      %s93 = sphi 0, %s95
      %s96 = sphi 0, %s93
      %s97 = sphi 0, %s96
      %s113 = sphi 0, %s97
    $region4: #{tpu_custom_call.1} parent=1 // loop_header_branch
      %18 = sbr.rel (%p16) target = $region8
    $region5: #{tpu_custom_call.1} parent=1 // loop_body
      %s20 = ssub.s32 %s15, 1
      %s21 = ssub.s32 %s15, 2
      %s22 = sadd.s32 %s15, 1
      %s23 = ssub.s32 %s15, %s22
      %p24 = scmp.eq.s32.totalorder %s23, 0
      %s26 = sadd.s32 %s25, 1
      %s27 = scalar_select %p24, %s25, %s26
      %p30 = pneg %p24
      %p31 = scmp.eq.s32.totalorder %s15, 3
      %p32 = por %p30, %p31
      %p33 = scmp.ne.s32.totalorder %s25, %s28
      %p34 = scmp.eq.s32.totalorder %s15, 0
      %p35 = por %p33, %p34
      %p36 = scmp.ne.s32.totalorder %s25, %s28
      %p37 = scmp.eq.s32.totalorder %s20, 3
      %p38 = por %p36, %p37
      %p39 = scmp.ne.s32.totalorder %s28, %s29
      %p40 = scmp.eq.s32.totalorder %s20, 0
      %p41 = por %p39, %p40
      %p42 = scmp.ne.s32.totalorder %s28, %s29
      %p43 = scmp.eq.s32.totalorder %s21, 3
      %p44 = por %p42, %p43
      %p46 = scmp.ne.s32.totalorder %s29, %s45
      %p47 = scmp.eq.s32.totalorder %s21, 0
      %p48 = por %p46, %p47
      %s50 = sadd.s32 %s49, 1
      %p53 = scmp.eq.s32.totalorder %s15, 3
      %p54 = scmp.ne.s32.totalorder %s49, %s51
      %p55 = scmp.eq.s32.totalorder %s15, 0
      %p56 = por %p54, %p55
      %p57 = scmp.ne.s32.totalorder %s49, %s51
      %p58 = scmp.eq.s32.totalorder %s20, 3
      %p59 = por %p57, %p58
      %p60 = scmp.ne.s32.totalorder %s51, %s52
      %p61 = scmp.eq.s32.totalorder %s20, 0
      %p62 = por %p60, %p61
      %p63 = scmp.ne.s32.totalorder %s51, %s52
      %p64 = scmp.eq.s32.totalorder %s21, 3
      %p65 = por %p63, %p64
      %p67 = scmp.ne.s32.totalorder %s52, %s66
      %p68 = scmp.eq.s32.totalorder %s21, 0
      %p69 = por %p67, %p68
      %s71 = sadd.s32 %s70, 1
      %p74 = scmp.eq.s32.totalorder %s15, 3
      %p75 = scmp.ne.s32.totalorder %s70, %s72
      %p76 = scmp.eq.s32.totalorder %s15, 0
      %p77 = por %p75, %p76
      %p78 = scmp.ne.s32.totalorder %s70, %s72
      %p79 = scmp.eq.s32.totalorder %s20, 3
      %p80 = por %p78, %p79
      %p81 = scmp.ne.s32.totalorder %s72, %s73
      %p82 = scmp.eq.s32.totalorder %s20, 0
      %p83 = por %p81, %p82
      %p84 = scmp.ne.s32.totalorder %s72, %s73
      %p85 = scmp.eq.s32.totalorder %s21, 3
      %p86 = por %p84, %p85
      %p88 = scmp.ne.s32.totalorder %s73, %s87
      %p89 = scmp.eq.s32.totalorder %s21, 0
      %p90 = por %p88, %p89
      %s91 = ssub.s32 %s15, %s22
      %p92 = scmp.eq.s32.totalorder %s91, 0
      %s94 = sadd.s32 %s93, 1
      %s95 = scalar_select %p92, %s93, %s94
      %p98 = pneg %p92
      %p99 = scmp.eq.s32.totalorder %s15, 3
      %p100 = por %p98, %p99
      %p101 = scmp.ne.s32.totalorder %s93, %s96
      %p102 = scmp.eq.s32.totalorder %s15, 0
      %p103 = por %p101, %p102
      %p104 = scmp.ne.s32.totalorder %s93, %s96
      %p105 = scmp.eq.s32.totalorder %s20, 3
      %p106 = por %p104, %p105
      %p107 = scmp.ne.s32.totalorder %s96, %s97
      %p108 = scmp.eq.s32.totalorder %s20, 0
      %p109 = por %p107, %p108
      %p110 = scmp.ne.s32.totalorder %s96, %s97
      %p111 = scmp.eq.s32.totalorder %s21, 3
      %p112 = por %p110, %p111
      %p114 = scmp.ne.s32.totalorder %s97, %s113
      %p115 = scmp.eq.s32.totalorder %s21, 0
      %p116 = por %p114, %p115
      %p117 = scmp.le.s32.totalorder 1, %s15
      %p118 = scmp.lt.s32.totalorder %s15, 5
      %p119 = pnand %p117, %p118
      %p120 = pneg %p119
      // Predicated region
      $region9: #{tpu_custom_call.1} parent=5 // pred_check
        _
      $region10: #{tpu_custom_call.1} parent=5 // pred_check_branch
        %122 = sbr.rel (%p119) target = $region12
      $region11: #{tpu_custom_call.1} parent=5 // pred_region
        %s123 = ssub.s32 %s15, 1
        // Predicated region
        $region13: #{tpu_custom_call.1} parent=11 // pred_check
          %p124 = pneg %p62
        $region14: #{tpu_custom_call.1} parent=11 // pred_check_branch
          %126 = sbr.rel (%p124) target = $region16
        $region15: #{tpu_custom_call.1} parent=11 // pred_region
          _
        $region16: #{tpu_custom_call.1} parent=11 // pred_fallthru
          _
        // Predicated region
        $region17: #{tpu_custom_call.1} parent=11 // pred_check
          %p127 = pneg %p83
        $region18: #{tpu_custom_call.1} parent=11 // pred_check_branch
          %129 = sbr.rel (%p127) target = $region20
        $region19: #{tpu_custom_call.1} parent=11 // pred_region
          _
        $region20: #{tpu_custom_call.1} parent=11 // pred_fallthru
          _
      $region12: #{tpu_custom_call.1} parent=5 // pred_fallthru
        _
      %p130 = scmp.lt.s32.totalorder %s15, 4
      // Predicated region
      $region21: #{tpu_custom_call.1} parent=5 // pred_check
        %p131 = pneg %p130
      $region22: #{tpu_custom_call.1} parent=5 // pred_check_branch
        %133 = sbr.rel (%p131) target = $region24
      $region23: #{tpu_custom_call.1} parent=5 // pred_region
        // Predicated region
        $region25: #{tpu_custom_call.1} parent=23 // pred_check
          %p134 = pneg %p35
        $region26: #{tpu_custom_call.1} parent=23 // pred_check_branch
          %136 = sbr.rel (%p134) target = $region28
        $region27: #{tpu_custom_call.1} parent=23 // pred_region
          %s137 = sand.u32 %s25, 1
          %s138 = scalar_lea.sflag [#allocation3], %s137
          %s139 = sand.u32 %s25, 1
          %s140 = smul.addr %s139, 1024
          %s141 = scalar_lea.vmem [#allocation2], %s140
          %143 = vsyncadd %s138, 0
          %s144 = smul.addr %s15, 128
          %s145 = smul.addr %s144, 8
          %s146 = scalar_lea.hbm %s0, %s145
          %s147 = sshll.u32 %s146, 4
          %s148 = int_to_ptr.hbm [resolvable:$true] %s147
          %s149 = sshll.u32 %s141, 4
          %s150 = int_to_ptr.vmem [resolvable:$true] %s149
          %155 = dma.hbm_to_vmem [thread:$0]  %s148, 16384, %s150, %s138, 256, 256, 16
        $region28: #{tpu_custom_call.1} parent=23 // pred_fallthru
          _
      $region24: #{tpu_custom_call.1} parent=5 // pred_fallthru
        _
      %p156 = scmp.le.s32.totalorder 1, %s15
      %p157 = scmp.lt.s32.totalorder %s15, 5
      %p158 = pnand %p156, %p157
      %p159 = pneg %p158
      // Predicated region
      $region29: #{tpu_custom_call.1} parent=5 // pred_check
        _
      $region30: #{tpu_custom_call.1} parent=5 // pred_check_branch
        %161 = sbr.rel (%p158) target = $region32
      $region31: #{tpu_custom_call.1} parent=5 // pred_region
        %s162 = ssub.s32 %s15, 1
        %s163 = sand.u32 %s28, 1
        %s164 = scalar_lea.sflag [#allocation3], %s163
        %s165 = sand.u32 %s28, 1
        %s166 = smul.addr %s165, 1024
        %s167 = scalar_lea.vmem [#allocation2], %s166
        // Predicated region
        $region33: #{tpu_custom_call.1} parent=31 // pred_check
          %p168 = pneg %p41
        $region34: #{tpu_custom_call.1} parent=31 // pred_check_branch
          %170 = sbr.rel (%p168) target = $region36
        $region35: #{tpu_custom_call.1} parent=31 // pred_region
          %172 = dma.done %s164, 16384
        $region36: #{tpu_custom_call.1} parent=31 // pred_fallthru
          _
        %s173 = sand.u32 %s28, 1
        %s174 = scalar_lea.sflag [#allocation3], %s173
        %s175 = sand.u32 %s28, 1
        %s176 = smul.addr %s175, 1024
        %s177 = scalar_lea.vmem [#allocation2], %s176
        %p178 = pneg %p41
        %p179 = pneg %p38
        %p180 = pneg %p62
        %p181 = pneg %p59
        %p182 = pneg %p83
        %p183 = pneg %p80
        %p184 = pneg %p109
        %p185 = pneg %p106
        %s186 = sand.u32 %s96, 1
        %s187 = scalar_lea.sflag [#allocation4], %s186
        %s188 = sand.u32 %s96, 1
        %s189 = smul.addr %s188, 1024
        %s190 = scalar_lea.vmem [#allocation5], %s189
        %v191 = vld [vmem:[%s167] sm:$0xff]
        %v192 = vld [vmem:[%s167 + $0x8] sm:$0xff]
        %v193 = vld [vmem:[%s167 + $0x10] sm:$0xff]
        %v194 = vld [vmem:[%s167 + $0x18] sm:$0xff]
        %v195 = vld [vmem:[%s167 + $0x20] sm:$0xff]
        %v196 = vld [vmem:[%s167 + $0x28] sm:$0xff]
        %v197 = vld [vmem:[%s167 + $0x30] sm:$0xff]
        %v198 = vld [vmem:[%s167 + $0x38] sm:$0xff]
        %v199 = vld [vmem:[%s167 + $0x40] sm:$0xff]
        %v200 = vld [vmem:[%s167 + $0x48] sm:$0xff]
        %v201 = vld [vmem:[%s167 + $0x50] sm:$0xff]
        %v202 = vld [vmem:[%s167 + $0x58] sm:$0xff]
        %v203 = vld [vmem:[%s167 + $0x60] sm:$0xff]
        %v204 = vld [vmem:[%s167 + $0x68] sm:$0xff]
        %v205 = vld [vmem:[%s167 + $0x70] sm:$0xff]
        %v206 = vld [vmem:[%s167 + $0x78] sm:$0xff]
        %v207 = vld [vmem:[%s167 + $0x80] sm:$0xff]
        %v208 = vld [vmem:[%s167 + $0x88] sm:$0xff]
        %v209 = vld [vmem:[%s167 + $0x90] sm:$0xff]
        %v210 = vld [vmem:[%s167 + $0x98] sm:$0xff]
        %v211 = vld [vmem:[%s167 + $0xa0] sm:$0xff]
        %v212 = vld [vmem:[%s167 + $0xa8] sm:$0xff]
        %v213 = vld [vmem:[%s167 + $0xb0] sm:$0xff]
        %v214 = vld [vmem:[%s167 + $0xb8] sm:$0xff]
        %v215 = vld [vmem:[%s167 + $0xc0] sm:$0xff]
        %v216 = vld [vmem:[%s167 + $0xc8] sm:$0xff]
        %v217 = vld [vmem:[%s167 + $0xd0] sm:$0xff]
        %v218 = vld [vmem:[%s167 + $0xd8] sm:$0xff]
        %v219 = vld [vmem:[%s167 + $0xe0] sm:$0xff]
        %v220 = vld [vmem:[%s167 + $0xe8] sm:$0xff]
        %v221 = vld [vmem:[%s167 + $0xf0] sm:$0xff]
        %v222 = vld [vmem:[%s167 + $0xf8] sm:$0xff]
        %v223 = vld [vmem:[%s167 + $0x100] sm:$0xff]
        %v224 = vld [vmem:[%s167 + $0x108] sm:$0xff]
        %v225 = vld [vmem:[%s167 + $0x110] sm:$0xff]
        %v226 = vld [vmem:[%s167 + $0x118] sm:$0xff]
        %v227 = vld [vmem:[%s167 + $0x120] sm:$0xff]
        %v228 = vld [vmem:[%s167 + $0x128] sm:$0xff]
        %v229 = vld [vmem:[%s167 + $0x130] sm:$0xff]
        %v230 = vld [vmem:[%s167 + $0x138] sm:$0xff]
        %v231 = vld [vmem:[%s167 + $0x140] sm:$0xff]
        %v232 = vld [vmem:[%s167 + $0x148] sm:$0xff]
        %v233 = vld [vmem:[%s167 + $0x150] sm:$0xff]
        %v234 = vld [vmem:[%s167 + $0x158] sm:$0xff]
        %v235 = vld [vmem:[%s167 + $0x160] sm:$0xff]
        %v236 = vld [vmem:[%s167 + $0x168] sm:$0xff]
        %v237 = vld [vmem:[%s167 + $0x170] sm:$0xff]
        %v238 = vld [vmem:[%s167 + $0x178] sm:$0xff]
        %v239 = vld [vmem:[%s167 + $0x180] sm:$0xff]
        %v240 = vld [vmem:[%s167 + $0x188] sm:$0xff]
        %v241 = vld [vmem:[%s167 + $0x190] sm:$0xff]
        %v242 = vld [vmem:[%s167 + $0x198] sm:$0xff]
        %v243 = vld [vmem:[%s167 + $0x1a0] sm:$0xff]
        %v244 = vld [vmem:[%s167 + $0x1a8] sm:$0xff]
        %v245 = vld [vmem:[%s167 + $0x1b0] sm:$0xff]
        %v246 = vld [vmem:[%s167 + $0x1b8] sm:$0xff]
        %v247 = vld [vmem:[%s167 + $0x1c0] sm:$0xff]
        %v248 = vld [vmem:[%s167 + $0x1c8] sm:$0xff]
        %v249 = vld [vmem:[%s167 + $0x1d0] sm:$0xff]
        %v250 = vld [vmem:[%s167 + $0x1d8] sm:$0xff]
        %v251 = vld [vmem:[%s167 + $0x1e0] sm:$0xff]
        %v252 = vld [vmem:[%s167 + $0x1e8] sm:$0xff]
        %v253 = vld [vmem:[%s167 + $0x1f0] sm:$0xff]
        %v254 = vld [vmem:[%s167 + $0x1f8] sm:$0xff]
        %v255 = vld [vmem:[%s167 + $0x200] sm:$0xff]
        %v256 = vld [vmem:[%s167 + $0x208] sm:$0xff]
        %v257 = vld [vmem:[%s167 + $0x210] sm:$0xff]
        %v258 = vld [vmem:[%s167 + $0x218] sm:$0xff]
        %v259 = vld [vmem:[%s167 + $0x220] sm:$0xff]
        %v260 = vld [vmem:[%s167 + $0x228] sm:$0xff]
        %v261 = vld [vmem:[%s167 + $0x230] sm:$0xff]
        %v262 = vld [vmem:[%s167 + $0x238] sm:$0xff]
        %v263 = vld [vmem:[%s167 + $0x240] sm:$0xff]
        %v264 = vld [vmem:[%s167 + $0x248] sm:$0xff]
        %v265 = vld [vmem:[%s167 + $0x250] sm:$0xff]
        %v266 = vld [vmem:[%s167 + $0x258] sm:$0xff]
        %v267 = vld [vmem:[%s167 + $0x260] sm:$0xff]
        %v268 = vld [vmem:[%s167 + $0x268] sm:$0xff]
        %v269 = vld [vmem:[%s167 + $0x270] sm:$0xff]
        %v270 = vld [vmem:[%s167 + $0x278] sm:$0xff]
        %v271 = vld [vmem:[%s167 + $0x280] sm:$0xff]
        %v272 = vld [vmem:[%s167 + $0x288] sm:$0xff]
        %v273 = vld [vmem:[%s167 + $0x290] sm:$0xff]
        %v274 = vld [vmem:[%s167 + $0x298] sm:$0xff]
        %v275 = vld [vmem:[%s167 + $0x2a0] sm:$0xff]
        %v276 = vld [vmem:[%s167 + $0x2a8] sm:$0xff]
        %v277 = vld [vmem:[%s167 + $0x2b0] sm:$0xff]
        %v278 = vld [vmem:[%s167 + $0x2b8] sm:$0xff]
        %v279 = vld [vmem:[%s167 + $0x2c0] sm:$0xff]
        %v280 = vld [vmem:[%s167 + $0x2c8] sm:$0xff]
        %v281 = vld [vmem:[%s167 + $0x2d0] sm:$0xff]
        %v282 = vld [vmem:[%s167 + $0x2d8] sm:$0xff]
        %v283 = vld [vmem:[%s167 + $0x2e0] sm:$0xff]
        %v284 = vld [vmem:[%s167 + $0x2e8] sm:$0xff]
        %v285 = vld [vmem:[%s167 + $0x2f0] sm:$0xff]
        %v286 = vld [vmem:[%s167 + $0x2f8] sm:$0xff]
        %v287 = vld [vmem:[%s167 + $0x300] sm:$0xff]
        %v288 = vld [vmem:[%s167 + $0x308] sm:$0xff]
        %v289 = vld [vmem:[%s167 + $0x310] sm:$0xff]
        %v290 = vld [vmem:[%s167 + $0x318] sm:$0xff]
        %v291 = vld [vmem:[%s167 + $0x320] sm:$0xff]
        %v292 = vld [vmem:[%s167 + $0x328] sm:$0xff]
        %v293 = vld [vmem:[%s167 + $0x330] sm:$0xff]
        %v294 = vld [vmem:[%s167 + $0x338] sm:$0xff]
        %v295 = vld [vmem:[%s167 + $0x340] sm:$0xff]
        %v296 = vld [vmem:[%s167 + $0x348] sm:$0xff]
        %v297 = vld [vmem:[%s167 + $0x350] sm:$0xff]
        %v298 = vld [vmem:[%s167 + $0x358] sm:$0xff]
        %v299 = vld [vmem:[%s167 + $0x360] sm:$0xff]
        %v300 = vld [vmem:[%s167 + $0x368] sm:$0xff]
        %v301 = vld [vmem:[%s167 + $0x370] sm:$0xff]
        %v302 = vld [vmem:[%s167 + $0x378] sm:$0xff]
        %v303 = vld [vmem:[%s167 + $0x380] sm:$0xff]
        %v304 = vld [vmem:[%s167 + $0x388] sm:$0xff]
        %v305 = vld [vmem:[%s167 + $0x390] sm:$0xff]
        %v306 = vld [vmem:[%s167 + $0x398] sm:$0xff]
        %v307 = vld [vmem:[%s167 + $0x3a0] sm:$0xff]
        %v308 = vld [vmem:[%s167 + $0x3a8] sm:$0xff]
        %v309 = vld [vmem:[%s167 + $0x3b0] sm:$0xff]
        %v310 = vld [vmem:[%s167 + $0x3b8] sm:$0xff]
        %v311 = vld [vmem:[%s167 + $0x3c0] sm:$0xff]
        %v312 = vld [vmem:[%s167 + $0x3c8] sm:$0xff]
        %v313 = vld [vmem:[%s167 + $0x3d0] sm:$0xff]
        %v314 = vld [vmem:[%s167 + $0x3d8] sm:$0xff]
        %v315 = vld [vmem:[%s167 + $0x3e0] sm:$0xff]
        %v316 = vld [vmem:[%s167 + $0x3e8] sm:$0xff]
        %v317 = vld [vmem:[%s167 + $0x3f0] sm:$0xff]
        %v318 = vld [vmem:[%s167 + $0x3f8] sm:$0xff]
        %v319 = vadd.f32 %v191, %v192
        %320 = vadd.xlane.f32.xlu0 %v319
        %v321 = vpop.xlane.xlu0 %320
        %v322 = vadd.f32 %v193, %v194
        %323 = vadd.xlane.f32.xlu0 %v322
        %v324 = vpop.xlane.xlu0 %323
        %v325 = vadd.f32 %v195, %v196
        %326 = vadd.xlane.f32.xlu0 %v325
        %v327 = vpop.xlane.xlu0 %326
        %v328 = vadd.f32 %v197, %v198
        %329 = vadd.xlane.f32.xlu0 %v328
        %v330 = vpop.xlane.xlu0 %329
        %v331 = vadd.f32 %v199, %v200
        %332 = vadd.xlane.f32.xlu0 %v331
        %v333 = vpop.xlane.xlu0 %332
        %v334 = vadd.f32 %v201, %v202
        %335 = vadd.xlane.f32.xlu0 %v334
        %v336 = vpop.xlane.xlu0 %335
        %v337 = vadd.f32 %v203, %v204
        %338 = vadd.xlane.f32.xlu0 %v337
        %v339 = vpop.xlane.xlu0 %338
        %v340 = vadd.f32 %v205, %v206
        %341 = vadd.xlane.f32.xlu0 %v340
        %v342 = vpop.xlane.xlu0 %341
        %v343 = vadd.f32 %v207, %v208
        %344 = vadd.xlane.f32.xlu0 %v343
        %v345 = vpop.xlane.xlu0 %344
        %v346 = vadd.f32 %v209, %v210
        %347 = vadd.xlane.f32.xlu0 %v346
        %v348 = vpop.xlane.xlu0 %347
        %v349 = vadd.f32 %v211, %v212
        %350 = vadd.xlane.f32.xlu0 %v349
        %v351 = vpop.xlane.xlu0 %350
        %v352 = vadd.f32 %v213, %v214
        %353 = vadd.xlane.f32.xlu0 %v352
        %v354 = vpop.xlane.xlu0 %353
        %v355 = vadd.f32 %v215, %v216
        %356 = vadd.xlane.f32.xlu0 %v355
        %v357 = vpop.xlane.xlu0 %356
        %v358 = vadd.f32 %v217, %v218
        %359 = vadd.xlane.f32.xlu0 %v358
        %v360 = vpop.xlane.xlu0 %359
        %v361 = vadd.f32 %v219, %v220
        %362 = vadd.xlane.f32.xlu0 %v361
        %v363 = vpop.xlane.xlu0 %362
        %v364 = vadd.f32 %v221, %v222
        %365 = vadd.xlane.f32.xlu0 %v364
        %v366 = vpop.xlane.xlu0 %365
        %v367 = vadd.f32 %v223, %v224
        %368 = vadd.xlane.f32.xlu0 %v367
        %v369 = vpop.xlane.xlu0 %368
        %v370 = vadd.f32 %v225, %v226
        %371 = vadd.xlane.f32.xlu0 %v370
        %v372 = vpop.xlane.xlu0 %371
        %v373 = vadd.f32 %v227, %v228
        %374 = vadd.xlane.f32.xlu0 %v373
        %v375 = vpop.xlane.xlu0 %374
        %v376 = vadd.f32 %v229, %v230
        %377 = vadd.xlane.f32.xlu0 %v376
        %v378 = vpop.xlane.xlu0 %377
        %v379 = vadd.f32 %v231, %v232
        %380 = vadd.xlane.f32.xlu0 %v379
        %v381 = vpop.xlane.xlu0 %380
        %v382 = vadd.f32 %v233, %v234
        %383 = vadd.xlane.f32.xlu0 %v382
        %v384 = vpop.xlane.xlu0 %383
        %v385 = vadd.f32 %v235, %v236
        %386 = vadd.xlane.f32.xlu0 %v385
        %v387 = vpop.xlane.xlu0 %386
        %v388 = vadd.f32 %v237, %v238
        %389 = vadd.xlane.f32.xlu0 %v388
        %v390 = vpop.xlane.xlu0 %389
        %v391 = vadd.f32 %v239, %v240
        %392 = vadd.xlane.f32.xlu0 %v391
        %v393 = vpop.xlane.xlu0 %392
        %v394 = vadd.f32 %v241, %v242
        %395 = vadd.xlane.f32.xlu0 %v394
        %v396 = vpop.xlane.xlu0 %395
        %v397 = vadd.f32 %v243, %v244
        %398 = vadd.xlane.f32.xlu0 %v397
        %v399 = vpop.xlane.xlu0 %398
        %v400 = vadd.f32 %v245, %v246
        %401 = vadd.xlane.f32.xlu0 %v400
        %v402 = vpop.xlane.xlu0 %401
        %v403 = vadd.f32 %v247, %v248
        %404 = vadd.xlane.f32.xlu0 %v403
        %v405 = vpop.xlane.xlu0 %404
        %v406 = vadd.f32 %v249, %v250
        %407 = vadd.xlane.f32.xlu0 %v406
        %v408 = vpop.xlane.xlu0 %407
        %v409 = vadd.f32 %v251, %v252
        %410 = vadd.xlane.f32.xlu0 %v409
        %v411 = vpop.xlane.xlu0 %410
        %v412 = vadd.f32 %v253, %v254
        %413 = vadd.xlane.f32.xlu0 %v412
        %v414 = vpop.xlane.xlu0 %413
        %v415 = vadd.f32 %v255, %v256
        %416 = vadd.xlane.f32.xlu0 %v415
        %v417 = vpop.xlane.xlu0 %416
        %v418 = vadd.f32 %v257, %v258
        %419 = vadd.xlane.f32.xlu0 %v418
        %v420 = vpop.xlane.xlu0 %419
        %v421 = vadd.f32 %v259, %v260
        %422 = vadd.xlane.f32.xlu0 %v421
        %v423 = vpop.xlane.xlu0 %422
        %v424 = vadd.f32 %v261, %v262
        %425 = vadd.xlane.f32.xlu0 %v424
        %v426 = vpop.xlane.xlu0 %425
        %v427 = vadd.f32 %v263, %v264
        %428 = vadd.xlane.f32.xlu0 %v427
        %v429 = vpop.xlane.xlu0 %428
        %v430 = vadd.f32 %v265, %v266
        %431 = vadd.xlane.f32.xlu0 %v430
        %v432 = vpop.xlane.xlu0 %431
        %v433 = vadd.f32 %v267, %v268
        %434 = vadd.xlane.f32.xlu0 %v433
        %v435 = vpop.xlane.xlu0 %434
        %v436 = vadd.f32 %v269, %v270
        %437 = vadd.xlane.f32.xlu0 %v436
        %v438 = vpop.xlane.xlu0 %437
        %v439 = vadd.f32 %v271, %v272
        %440 = vadd.xlane.f32.xlu0 %v439
        %v441 = vpop.xlane.xlu0 %440
        %v442 = vadd.f32 %v273, %v274
        %443 = vadd.xlane.f32.xlu0 %v442
        %v444 = vpop.xlane.xlu0 %443
        %v445 = vadd.f32 %v275, %v276
        %446 = vadd.xlane.f32.xlu0 %v445
        %v447 = vpop.xlane.xlu0 %446
        %v448 = vadd.f32 %v277, %v278
        %449 = vadd.xlane.f32.xlu0 %v448
        %v450 = vpop.xlane.xlu0 %449
        %v451 = vadd.f32 %v279, %v280
        %452 = vadd.xlane.f32.xlu0 %v451
        %v453 = vpop.xlane.xlu0 %452
        %v454 = vadd.f32 %v281, %v282
        %455 = vadd.xlane.f32.xlu0 %v454
        %v456 = vpop.xlane.xlu0 %455
        %v457 = vadd.f32 %v283, %v284
        %458 = vadd.xlane.f32.xlu0 %v457
        %v459 = vpop.xlane.xlu0 %458
        %v460 = vadd.f32 %v285, %v286
        %461 = vadd.xlane.f32.xlu0 %v460
        %v462 = vpop.xlane.xlu0 %461
        %v463 = vadd.f32 %v287, %v288
        %464 = vadd.xlane.f32.xlu0 %v463
        %v465 = vpop.xlane.xlu0 %464
        %v466 = vadd.f32 %v289, %v290
        %467 = vadd.xlane.f32.xlu0 %v466
        %v468 = vpop.xlane.xlu0 %467
        %v469 = vadd.f32 %v291, %v292
        %470 = vadd.xlane.f32.xlu0 %v469
        %v471 = vpop.xlane.xlu0 %470
        %v472 = vadd.f32 %v293, %v294
        %473 = vadd.xlane.f32.xlu0 %v472
        %v474 = vpop.xlane.xlu0 %473
        %v475 = vadd.f32 %v295, %v296
        %476 = vadd.xlane.f32.xlu0 %v475
        %v477 = vpop.xlane.xlu0 %476
        %v478 = vadd.f32 %v297, %v298
        %479 = vadd.xlane.f32.xlu0 %v478
        %v480 = vpop.xlane.xlu0 %479
        %v481 = vadd.f32 %v299, %v300
        %482 = vadd.xlane.f32.xlu0 %v481
        %v483 = vpop.xlane.xlu0 %482
        %v484 = vadd.f32 %v301, %v302
        %485 = vadd.xlane.f32.xlu0 %v484
        %v486 = vpop.xlane.xlu0 %485
        %v487 = vadd.f32 %v303, %v304
        %488 = vadd.xlane.f32.xlu0 %v487
        %v489 = vpop.xlane.xlu0 %488
        %v490 = vadd.f32 %v305, %v306
        %491 = vadd.xlane.f32.xlu0 %v490
        %v492 = vpop.xlane.xlu0 %491
        %v493 = vadd.f32 %v307, %v308
        %494 = vadd.xlane.f32.xlu0 %v493
        %v495 = vpop.xlane.xlu0 %494
        %v496 = vadd.f32 %v309, %v310
        %497 = vadd.xlane.f32.xlu0 %v496
        %v498 = vpop.xlane.xlu0 %497
        %v499 = vadd.f32 %v311, %v312
        %500 = vadd.xlane.f32.xlu0 %v499
        %v501 = vpop.xlane.xlu0 %500
        %v502 = vadd.f32 %v313, %v314
        %503 = vadd.xlane.f32.xlu0 %v502
        %v504 = vpop.xlane.xlu0 %503
        %v505 = vadd.f32 %v315, %v316
        %506 = vadd.xlane.f32.xlu0 %v505
        %v507 = vpop.xlane.xlu0 %506
        %v508 = vadd.f32 %v317, %v318
        %509 = vadd.xlane.f32.xlu0 %v508
        %v510 = vpop.xlane.xlu0 %509
        %v511 = vmul.f32 %v321, 0.00390625
        %v512 = vmul.f32 %v324, 0.00390625
        %v513 = vmul.f32 %v327, 0.00390625
        %v514 = vmul.f32 %v330, 0.00390625
        %v515 = vmul.f32 %v333, 0.00390625
        %v516 = vmul.f32 %v336, 0.00390625
        %v517 = vmul.f32 %v339, 0.00390625
        %v518 = vmul.f32 %v342, 0.00390625
        %v519 = vmul.f32 %v345, 0.00390625
        %v520 = vmul.f32 %v348, 0.00390625
        %v521 = vmul.f32 %v351, 0.00390625
        %v522 = vmul.f32 %v354, 0.00390625
        %v523 = vmul.f32 %v357, 0.00390625
        %v524 = vmul.f32 %v360, 0.00390625
        %v525 = vmul.f32 %v363, 0.00390625
        %v526 = vmul.f32 %v366, 0.00390625
        %v527 = vmul.f32 %v369, 0.00390625
        %v528 = vmul.f32 %v372, 0.00390625
        %v529 = vmul.f32 %v375, 0.00390625
        %v530 = vmul.f32 %v378, 0.00390625
        %v531 = vmul.f32 %v381, 0.00390625
        %v532 = vmul.f32 %v384, 0.00390625
        %v533 = vmul.f32 %v387, 0.00390625
        %v534 = vmul.f32 %v390, 0.00390625
        %v535 = vmul.f32 %v393, 0.00390625
        %v536 = vmul.f32 %v396, 0.00390625
        %v537 = vmul.f32 %v399, 0.00390625
        %v538 = vmul.f32 %v402, 0.00390625
        %v539 = vmul.f32 %v405, 0.00390625
        %v540 = vmul.f32 %v408, 0.00390625
        %v541 = vmul.f32 %v411, 0.00390625
        %v542 = vmul.f32 %v414, 0.00390625
        %v543 = vmul.f32 %v417, 0.00390625
        %v544 = vmul.f32 %v420, 0.00390625
        %v545 = vmul.f32 %v423, 0.00390625
        %v546 = vmul.f32 %v426, 0.00390625
        %v547 = vmul.f32 %v429, 0.00390625
        %v548 = vmul.f32 %v432, 0.00390625
        %v549 = vmul.f32 %v435, 0.00390625
        %v550 = vmul.f32 %v438, 0.00390625
        %v551 = vmul.f32 %v441, 0.00390625
        %v552 = vmul.f32 %v444, 0.00390625
        %v553 = vmul.f32 %v447, 0.00390625
        %v554 = vmul.f32 %v450, 0.00390625
        %v555 = vmul.f32 %v453, 0.00390625
        %v556 = vmul.f32 %v456, 0.00390625
        %v557 = vmul.f32 %v459, 0.00390625
        %v558 = vmul.f32 %v462, 0.00390625
        %v559 = vmul.f32 %v465, 0.00390625
        %v560 = vmul.f32 %v468, 0.00390625
        %v561 = vmul.f32 %v471, 0.00390625
        %v562 = vmul.f32 %v474, 0.00390625
        %v563 = vmul.f32 %v477, 0.00390625
        %v564 = vmul.f32 %v480, 0.00390625
        %v565 = vmul.f32 %v483, 0.00390625
        %v566 = vmul.f32 %v486, 0.00390625
        %v567 = vmul.f32 %v489, 0.00390625
        %v568 = vmul.f32 %v492, 0.00390625
        %v569 = vmul.f32 %v495, 0.00390625
        %v570 = vmul.f32 %v498, 0.00390625
        %v571 = vmul.f32 %v501, 0.00390625
        %v572 = vmul.f32 %v504, 0.00390625
        %v573 = vmul.f32 %v507, 0.00390625
        %v574 = vmul.f32 %v510, 0.00390625
        %v575 = vld [vmem:[%s1] sm:$0xff]
        %v576 = vld [vmem:[%s1 + $0x8] sm:$0xff]
        %v577 = vld [vmem:[%s1 + $0x10] sm:$0xff]
        %v578 = vld [vmem:[%s1 + $0x18] sm:$0xff]
        %v579 = vld [vmem:[%s1 + $0x20] sm:$0xff]
        %v580 = vld [vmem:[%s1 + $0x28] sm:$0xff]
        %v581 = vld [vmem:[%s1 + $0x30] sm:$0xff]
        %v582 = vld [vmem:[%s1 + $0x38] sm:$0xff]
        %v583 = vld [vmem:[%s1 + $0x40] sm:$0xff]
        %v584 = vld [vmem:[%s1 + $0x48] sm:$0xff]
        %v585 = vld [vmem:[%s1 + $0x50] sm:$0xff]
        %v586 = vld [vmem:[%s1 + $0x58] sm:$0xff]
        %v587 = vld [vmem:[%s1 + $0x60] sm:$0xff]
        %v588 = vld [vmem:[%s1 + $0x68] sm:$0xff]
        %v589 = vld [vmem:[%s1 + $0x70] sm:$0xff]
        %v590 = vld [vmem:[%s1 + $0x78] sm:$0xff]
        %v655 = vlaneseq
        %v656 = vand.u32 %v655, 127
        %v657 = vperm.slane %v511, %v656
        %v658 = vadd.s32 %v656, 4294967288
        %v659 = vperm.slane %v512, %v658
        %vm660 = vcmask 130112
        %v661 = vsel %vm660, %v659, %v657
        %v662 = vadd.s32 %v656, 4294967280
        %v663 = vperm.slane %v513, %v662
        %vm664 = vcmask 195712
        %v665 = vsel %vm664, %v663, %v661
        %v666 = vadd.s32 %v656, 4294967272
        %v667 = vperm.slane %v514, %v666
        %vm668 = vcmask 261312
        %v669 = vsel %vm668, %v667, %v665
        %v670 = vadd.s32 %v656, 4294967264
        %v671 = vperm.slane %v515, %v670
        %vm672 = vcmask 326912
        %v673 = vsel %vm672, %v671, %v669
        %v674 = vadd.s32 %v656, 4294967256
        %v675 = vperm.slane %v516, %v674
        %vm676 = vcmask 392512
        %v677 = vsel %vm676, %v675, %v673
        %v678 = vadd.s32 %v656, 4294967248
        %v679 = vperm.slane %v517, %v678
        %vm680 = vcmask 458112
        %v681 = vsel %vm680, %v679, %v677
        %v682 = vadd.s32 %v656, 4294967240
        %v683 = vperm.slane %v518, %v682
        %vm684 = vcmask 523712
        %v685 = vsel %vm684, %v683, %v681
        %v686 = vadd.s32 %v656, 4294967232
        %v687 = vperm.slane %v519, %v686
        %vm688 = vcmask 589312
        %v689 = vsel %vm688, %v687, %v685
        %v690 = vadd.s32 %v656, 4294967224
        %v691 = vperm.slane %v520, %v690
        %vm692 = vcmask 654912
        %v693 = vsel %vm692, %v691, %v689
        %v694 = vadd.s32 %v656, 4294967216
        %v695 = vperm.slane %v521, %v694
        %vm696 = vcmask 720512
        %v697 = vsel %vm696, %v695, %v693
        %v698 = vadd.s32 %v656, 4294967208
        %v699 = vperm.slane %v522, %v698
        %vm700 = vcmask 786112
        %v701 = vsel %vm700, %v699, %v697
        %v702 = vadd.s32 %v656, 4294967200
        %v703 = vperm.slane %v523, %v702
        %vm704 = vcmask 851712
        %v705 = vsel %vm704, %v703, %v701
        %v706 = vadd.s32 %v656, 4294967192
        %v707 = vperm.slane %v524, %v706
        %vm708 = vcmask 917312
        %v709 = vsel %vm708, %v707, %v705
        %v710 = vadd.s32 %v656, 4294967184
        %v711 = vperm.slane %v525, %v710
        %vm712 = vcmask 982912
        %v713 = vsel %vm712, %v711, %v709
        %v714 = vadd.s32 %v656, 4294967176
        %v715 = vperm.slane %v526, %v714
        %vm716 = vcmask 1048512
        %v717 = vsel %vm716, %v715, %v713
        %v718 = vperm.slane %v527, %v656
        %v719 = vperm.slane %v528, %v658
        %v720 = vsel %vm660, %v719, %v718
        %v721 = vperm.slane %v529, %v662
        %v722 = vsel %vm664, %v721, %v720
        %v723 = vperm.slane %v530, %v666
        %v724 = vsel %vm668, %v723, %v722
        %v725 = vperm.slane %v531, %v670
        %v726 = vsel %vm672, %v725, %v724
        %v727 = vperm.slane %v532, %v674
        %v728 = vsel %vm676, %v727, %v726
        %v729 = vperm.slane %v533, %v678
        %v730 = vsel %vm680, %v729, %v728
        %v731 = vperm.slane %v534, %v682
        %v732 = vsel %vm684, %v731, %v730
        %v733 = vperm.slane %v535, %v686
        %v734 = vsel %vm688, %v733, %v732
        %v735 = vperm.slane %v536, %v690
        %v736 = vsel %vm692, %v735, %v734
        %v737 = vperm.slane %v537, %v694
        %v738 = vsel %vm696, %v737, %v736
        %v739 = vperm.slane %v538, %v698
        %v740 = vsel %vm700, %v739, %v738
        %v741 = vperm.slane %v539, %v702
        %v742 = vsel %vm704, %v741, %v740
        %v743 = vperm.slane %v540, %v706
        %v744 = vsel %vm708, %v743, %v742
        %v745 = vperm.slane %v541, %v710
        %v746 = vsel %vm712, %v745, %v744
        %v747 = vperm.slane %v542, %v714
        %v748 = vsel %vm716, %v747, %v746
        %v749 = vperm.slane %v543, %v656
        %v750 = vperm.slane %v544, %v658
        %v751 = vsel %vm660, %v750, %v749
        %v752 = vperm.slane %v545, %v662
        %v753 = vsel %vm664, %v752, %v751
        %v754 = vperm.slane %v546, %v666
        %v755 = vsel %vm668, %v754, %v753
        %v756 = vperm.slane %v547, %v670
        %v757 = vsel %vm672, %v756, %v755
        %v758 = vperm.slane %v548, %v674
        %v759 = vsel %vm676, %v758, %v757
        %v760 = vperm.slane %v549, %v678
        %v761 = vsel %vm680, %v760, %v759
        %v762 = vperm.slane %v550, %v682
        %v763 = vsel %vm684, %v762, %v761
        %v764 = vperm.slane %v551, %v686
        %v765 = vsel %vm688, %v764, %v763
        %v766 = vperm.slane %v552, %v690
        %v767 = vsel %vm692, %v766, %v765
        %v768 = vperm.slane %v553, %v694
        %v769 = vsel %vm696, %v768, %v767
        %v770 = vperm.slane %v554, %v698
        %v771 = vsel %vm700, %v770, %v769
        %v772 = vperm.slane %v555, %v702
        %v773 = vsel %vm704, %v772, %v771
        %v774 = vperm.slane %v556, %v706
        %v775 = vsel %vm708, %v774, %v773
        %v776 = vperm.slane %v557, %v710
        %v777 = vsel %vm712, %v776, %v775
        %v778 = vperm.slane %v558, %v714
        %v779 = vsel %vm716, %v778, %v777
        %v780 = vperm.slane %v559, %v656
        %v781 = vperm.slane %v560, %v658
        %v782 = vsel %vm660, %v781, %v780
        %v783 = vperm.slane %v561, %v662
        %v784 = vsel %vm664, %v783, %v782
        %v785 = vperm.slane %v562, %v666
        %v786 = vsel %vm668, %v785, %v784
        %v787 = vperm.slane %v563, %v670
        %v788 = vsel %vm672, %v787, %v786
        %v789 = vperm.slane %v564, %v674
        %v790 = vsel %vm676, %v789, %v788
        %v791 = vperm.slane %v565, %v678
        %v792 = vsel %vm680, %v791, %v790
        %v793 = vperm.slane %v566, %v682
        %v794 = vsel %vm684, %v793, %v792
        %v795 = vperm.slane %v567, %v686
        %v796 = vsel %vm688, %v795, %v794
        %v797 = vperm.slane %v568, %v690
        %v798 = vsel %vm692, %v797, %v796
        %v799 = vperm.slane %v569, %v694
        %v800 = vsel %vm696, %v799, %v798
        %v801 = vperm.slane %v570, %v698
        %v802 = vsel %vm700, %v801, %v800
        %v803 = vperm.slane %v571, %v702
        %v804 = vsel %vm704, %v803, %v802
        %v805 = vperm.slane %v572, %v706
        %v806 = vsel %vm708, %v805, %v804
        %v807 = vperm.slane %v573, %v710
        %v808 = vsel %vm712, %v807, %v806
        %v809 = vperm.slane %v574, %v714
        %v810 = vsel %vm716, %v809, %v808
        %815 = vmatpush.xpose.msra.mxu0 0.0
        %816 = vmatpush.xpose.msra.mxu0 0.0
        %817 = vmatpush.xpose.msra.mxu0 0.0
        %818 = vmatpush.xpose.msra.mxu0 0.0
        %819 = vmatpush.xpose.msra.mxu0 0.0
        %820 = vmatpush.xpose.msra.mxu0 0.0
        %821 = vmatpush.xpose.msra.mxu0 0.0
        %822 = vmatpush.xpose.msra.mxu0 0.0
        %823 = vmatpush.xpose.msra.mxu0 0.0
        %824 = vmatpush.xpose.msra.mxu0 0.0
        %825 = vmatpush.xpose.msra.mxu0 0.0
        %826 = vmatpush.xpose.msra.mxu0 0.0
        %827 = vmatpush.xpose.msra.mxu0 %v587
        %828 = vmatpush.xpose.msra.mxu0 %v583
        %829 = vmatpush.xpose.msra.mxu0 %v579
        %830 = vmatpush.xpose.msra.mxu0 %v575
        %831 = vmatmul.f32.gmra.mxu0 %v717
        %v832 = vpop.f32.mrf.mxu0
        %v833 = vadd.f32 0.0, %v832
        %834 = vdwg.mxu0
        %835 = vmatpush.xpose.msra.mxu0 0.0
        %836 = vmatpush.xpose.msra.mxu0 0.0
        %837 = vmatpush.xpose.msra.mxu0 0.0
        %838 = vmatpush.xpose.msra.mxu0 0.0
        %839 = vmatpush.xpose.msra.mxu0 0.0
        %840 = vmatpush.xpose.msra.mxu0 0.0
        %841 = vmatpush.xpose.msra.mxu0 0.0
        %842 = vmatpush.xpose.msra.mxu0 0.0
        %843 = vmatpush.xpose.msra.mxu0 0.0
        %844 = vmatpush.xpose.msra.mxu0 0.0
        %845 = vmatpush.xpose.msra.mxu0 0.0
        %846 = vmatpush.xpose.msra.mxu0 0.0
        %847 = vmatpush.xpose.msra.mxu0 %v588
        %848 = vmatpush.xpose.msra.mxu0 %v584
        %849 = vmatpush.xpose.msra.mxu0 %v580
        %850 = vmatpush.xpose.msra.mxu0 %v576
        %851 = vmatmul.f32.gmra.mxu0 %v748
        %v852 = vpop.f32.mrf.mxu0
        %v853 = vadd.f32 %v833, %v852
        %854 = vdwg.mxu0
        %855 = vmatpush.xpose.msra.mxu0 0.0
        %856 = vmatpush.xpose.msra.mxu0 0.0
        %857 = vmatpush.xpose.msra.mxu0 0.0
        %858 = vmatpush.xpose.msra.mxu0 0.0
        %859 = vmatpush.xpose.msra.mxu0 0.0
        %860 = vmatpush.xpose.msra.mxu0 0.0
        %861 = vmatpush.xpose.msra.mxu0 0.0
        %862 = vmatpush.xpose.msra.mxu0 0.0
        %863 = vmatpush.xpose.msra.mxu0 0.0
        %864 = vmatpush.xpose.msra.mxu0 0.0
        %865 = vmatpush.xpose.msra.mxu0 0.0
        %866 = vmatpush.xpose.msra.mxu0 0.0
        %867 = vmatpush.xpose.msra.mxu0 %v589
        %868 = vmatpush.xpose.msra.mxu0 %v585
        %869 = vmatpush.xpose.msra.mxu0 %v581
        %870 = vmatpush.xpose.msra.mxu0 %v577
        %871 = vmatmul.f32.gmra.mxu0 %v779
        %v872 = vpop.f32.mrf.mxu0
        %v873 = vadd.f32 %v853, %v872
        %874 = vdwg.mxu0
        %875 = vmatpush.xpose.msra.mxu0 0.0
        %876 = vmatpush.xpose.msra.mxu0 0.0
        %877 = vmatpush.xpose.msra.mxu0 0.0
        %878 = vmatpush.xpose.msra.mxu0 0.0
        %879 = vmatpush.xpose.msra.mxu0 0.0
        %880 = vmatpush.xpose.msra.mxu0 0.0
        %881 = vmatpush.xpose.msra.mxu0 0.0
        %882 = vmatpush.xpose.msra.mxu0 0.0
        %883 = vmatpush.xpose.msra.mxu0 0.0
        %884 = vmatpush.xpose.msra.mxu0 0.0
        %885 = vmatpush.xpose.msra.mxu0 0.0
        %886 = vmatpush.xpose.msra.mxu0 0.0
        %887 = vmatpush.xpose.msra.mxu0 %v590
        %888 = vmatpush.xpose.msra.mxu0 %v586
        %889 = vmatpush.xpose.msra.mxu0 %v582
        %890 = vmatpush.xpose.msra.mxu0 %v578
        %891 = vmatmul.f32.gmra.mxu0 %v810
        %v892 = vpop.f32.mrf.mxu0
        %v893 = vadd.f32 %v873, %v892
        %894 = vdwg.mxu0
        %v895 = vmax.f32 %v893, 0.0
        %v896 = vld [vmem:[%s2] sm:$0xff]
        %v897 = vld [vmem:[%s2 + $0x8] sm:$0xff]
        %v898 = vld [vmem:[%s2 + $0x10] sm:$0xff]
        %v899 = vld [vmem:[%s2 + $0x18] sm:$0xff]
        %v900 = vld [vmem:[%s2 + $0x20] sm:$0xff]
        %v901 = vld [vmem:[%s2 + $0x28] sm:$0xff]
        %v902 = vld [vmem:[%s2 + $0x30] sm:$0xff]
        %v903 = vld [vmem:[%s2 + $0x38] sm:$0xff]
        %v904 = vld [vmem:[%s2 + $0x40] sm:$0xff]
        %v905 = vld [vmem:[%s2 + $0x48] sm:$0xff]
        %v906 = vld [vmem:[%s2 + $0x50] sm:$0xff]
        %v907 = vld [vmem:[%s2 + $0x58] sm:$0xff]
        %v908 = vld [vmem:[%s2 + $0x60] sm:$0xff]
        %v909 = vld [vmem:[%s2 + $0x68] sm:$0xff]
        %v910 = vld [vmem:[%s2 + $0x70] sm:$0xff]
        %v911 = vld [vmem:[%s2 + $0x78] sm:$0xff]
        %v912 = vld [vmem:[%s2 + $0x80] sm:$0xff]
        %v913 = vld [vmem:[%s2 + $0x88] sm:$0xff]
        %v914 = vld [vmem:[%s2 + $0x90] sm:$0xff]
        %v915 = vld [vmem:[%s2 + $0x98] sm:$0xff]
        %v916 = vld [vmem:[%s2 + $0xa0] sm:$0xff]
        %v917 = vld [vmem:[%s2 + $0xa8] sm:$0xff]
        %v918 = vld [vmem:[%s2 + $0xb0] sm:$0xff]
        %v919 = vld [vmem:[%s2 + $0xb8] sm:$0xff]
        %v920 = vld [vmem:[%s2 + $0xc0] sm:$0xff]
        %v921 = vld [vmem:[%s2 + $0xc8] sm:$0xff]
        %v922 = vld [vmem:[%s2 + $0xd0] sm:$0xff]
        %v923 = vld [vmem:[%s2 + $0xd8] sm:$0xff]
        %v924 = vld [vmem:[%s2 + $0xe0] sm:$0xff]
        %v925 = vld [vmem:[%s2 + $0xe8] sm:$0xff]
        %v926 = vld [vmem:[%s2 + $0xf0] sm:$0xff]
        %v927 = vld [vmem:[%s2 + $0xf8] sm:$0xff]
        %v928 = vld [vmem:[%s2 + $0x100] sm:$0xff]
        %v929 = vld [vmem:[%s2 + $0x108] sm:$0xff]
        %v930 = vld [vmem:[%s2 + $0x110] sm:$0xff]
        %v931 = vld [vmem:[%s2 + $0x118] sm:$0xff]
        %v932 = vld [vmem:[%s2 + $0x120] sm:$0xff]
        %v933 = vld [vmem:[%s2 + $0x128] sm:$0xff]
        %v934 = vld [vmem:[%s2 + $0x130] sm:$0xff]
        %v935 = vld [vmem:[%s2 + $0x138] sm:$0xff]
        %v936 = vld [vmem:[%s2 + $0x140] sm:$0xff]
        %v937 = vld [vmem:[%s2 + $0x148] sm:$0xff]
        %v938 = vld [vmem:[%s2 + $0x150] sm:$0xff]
        %v939 = vld [vmem:[%s2 + $0x158] sm:$0xff]
        %v940 = vld [vmem:[%s2 + $0x160] sm:$0xff]
        %v941 = vld [vmem:[%s2 + $0x168] sm:$0xff]
        %v942 = vld [vmem:[%s2 + $0x170] sm:$0xff]
        %v943 = vld [vmem:[%s2 + $0x178] sm:$0xff]
        %v944 = vld [vmem:[%s2 + $0x180] sm:$0xff]
        %v945 = vld [vmem:[%s2 + $0x188] sm:$0xff]
        %v946 = vld [vmem:[%s2 + $0x190] sm:$0xff]
        %v947 = vld [vmem:[%s2 + $0x198] sm:$0xff]
        %v948 = vld [vmem:[%s2 + $0x1a0] sm:$0xff]
        %v949 = vld [vmem:[%s2 + $0x1a8] sm:$0xff]
        %v950 = vld [vmem:[%s2 + $0x1b0] sm:$0xff]
        %v951 = vld [vmem:[%s2 + $0x1b8] sm:$0xff]
        %v952 = vld [vmem:[%s2 + $0x1c0] sm:$0xff]
        %v953 = vld [vmem:[%s2 + $0x1c8] sm:$0xff]
        %v954 = vld [vmem:[%s2 + $0x1d0] sm:$0xff]
        %v955 = vld [vmem:[%s2 + $0x1d8] sm:$0xff]
        %v956 = vld [vmem:[%s2 + $0x1e0] sm:$0xff]
        %v957 = vld [vmem:[%s2 + $0x1e8] sm:$0xff]
        %v958 = vld [vmem:[%s2 + $0x1f0] sm:$0xff]
        %v959 = vld [vmem:[%s2 + $0x1f8] sm:$0xff]
        %vm960 = vcmask 261120
        %v962 = vsel %vm960, %v895, 0
        %v965 = vsel %vm960, %v896, 0
        %v968 = vsel %vm960, %v897, 0
        %v971 = vsel %vm960, %v898, 0
        %v974 = vsel %vm960, %v899, 0
        %v977 = vsel %vm960, %v900, 0
        %v980 = vsel %vm960, %v901, 0
        %v983 = vsel %vm960, %v902, 0
        %v986 = vsel %vm960, %v903, 0
        %v989 = vsel %vm960, %v904, 0
        %v992 = vsel %vm960, %v905, 0
        %v995 = vsel %vm960, %v906, 0
        %v998 = vsel %vm960, %v907, 0
        %v1001 = vsel %vm960, %v908, 0
        %v1004 = vsel %vm960, %v909, 0
        %v1007 = vsel %vm960, %v910, 0
        %v1010 = vsel %vm960, %v911, 0
        %v1013 = vsel %vm960, %v912, 0
        %v1016 = vsel %vm960, %v913, 0
        %v1019 = vsel %vm960, %v914, 0
        %v1022 = vsel %vm960, %v915, 0
        %v1025 = vsel %vm960, %v916, 0
        %v1028 = vsel %vm960, %v917, 0
        %v1031 = vsel %vm960, %v918, 0
        %v1034 = vsel %vm960, %v919, 0
        %v1037 = vsel %vm960, %v920, 0
        %v1040 = vsel %vm960, %v921, 0
        %v1043 = vsel %vm960, %v922, 0
        %v1046 = vsel %vm960, %v923, 0
        %v1049 = vsel %vm960, %v924, 0
        %v1052 = vsel %vm960, %v925, 0
        %v1055 = vsel %vm960, %v926, 0
        %v1058 = vsel %vm960, %v927, 0
        %v1061 = vsel %vm960, %v928, 0
        %v1064 = vsel %vm960, %v929, 0
        %v1067 = vsel %vm960, %v930, 0
        %v1070 = vsel %vm960, %v931, 0
        %v1073 = vsel %vm960, %v932, 0
        %v1076 = vsel %vm960, %v933, 0
        %v1079 = vsel %vm960, %v934, 0
        %v1082 = vsel %vm960, %v935, 0
        %v1085 = vsel %vm960, %v936, 0
        %v1088 = vsel %vm960, %v937, 0
        %v1091 = vsel %vm960, %v938, 0
        %v1094 = vsel %vm960, %v939, 0
        %v1097 = vsel %vm960, %v940, 0
        %v1100 = vsel %vm960, %v941, 0
        %v1103 = vsel %vm960, %v942, 0
        %v1106 = vsel %vm960, %v943, 0
        %v1109 = vsel %vm960, %v944, 0
        %v1112 = vsel %vm960, %v945, 0
        %v1115 = vsel %vm960, %v946, 0
        %v1118 = vsel %vm960, %v947, 0
        %v1121 = vsel %vm960, %v948, 0
        %v1124 = vsel %vm960, %v949, 0
        %v1127 = vsel %vm960, %v950, 0
        %v1130 = vsel %vm960, %v951, 0
        %v1133 = vsel %vm960, %v952, 0
        %v1136 = vsel %vm960, %v953, 0
        %v1139 = vsel %vm960, %v954, 0
        %v1142 = vsel %vm960, %v955, 0
        %v1145 = vsel %vm960, %v956, 0
        %v1148 = vsel %vm960, %v957, 0
        %v1151 = vsel %vm960, %v958, 0
        %v1154 = vsel %vm960, %v959, 0
        %1156 = vmatpush.xpose.msra.mxu0 %v1010
        %1157 = vmatpush.xpose.msra.mxu0 %v1007
        %1158 = vmatpush.xpose.msra.mxu0 %v1004
        %1159 = vmatpush.xpose.msra.mxu0 %v1001
        %1160 = vmatpush.xpose.msra.mxu0 %v998
        %1161 = vmatpush.xpose.msra.mxu0 %v995
        %1162 = vmatpush.xpose.msra.mxu0 %v992
        %1163 = vmatpush.xpose.msra.mxu0 %v989
        %1164 = vmatpush.xpose.msra.mxu0 %v986
        %1165 = vmatpush.xpose.msra.mxu0 %v983
        %1166 = vmatpush.xpose.msra.mxu0 %v980
        %1167 = vmatpush.xpose.msra.mxu0 %v977
        %1168 = vmatpush.xpose.msra.mxu0 %v974
        %1169 = vmatpush.xpose.msra.mxu0 %v971
        %1170 = vmatpush.xpose.msra.mxu0 %v968
        %1171 = vmatpush.xpose.msra.mxu0 %v965
        %1172 = vmatmul.f32.gmra.mxu0 %v962
        %v1173 = vpop.f32.mrf.mxu0
        %v1174 = vadd.f32 0.0, %v1173
        %1175 = vdwg.mxu0
        %1176 = vmatpush.xpose.msra.mxu0 %v1058
        %1177 = vmatpush.xpose.msra.mxu0 %v1055
        %1178 = vmatpush.xpose.msra.mxu0 %v1052
        %1179 = vmatpush.xpose.msra.mxu0 %v1049
        %1180 = vmatpush.xpose.msra.mxu0 %v1046
        %1181 = vmatpush.xpose.msra.mxu0 %v1043
        %1182 = vmatpush.xpose.msra.mxu0 %v1040
        %1183 = vmatpush.xpose.msra.mxu0 %v1037
        %1184 = vmatpush.xpose.msra.mxu0 %v1034
        %1185 = vmatpush.xpose.msra.mxu0 %v1031
        %1186 = vmatpush.xpose.msra.mxu0 %v1028
        %1187 = vmatpush.xpose.msra.mxu0 %v1025
        %1188 = vmatpush.xpose.msra.mxu0 %v1022
        %1189 = vmatpush.xpose.msra.mxu0 %v1019
        %1190 = vmatpush.xpose.msra.mxu0 %v1016
        %1191 = vmatpush.xpose.msra.mxu0 %v1013
        %1192 = vmatmul.f32.gmra.mxu0 %v962
        %v1193 = vpop.f32.mrf.mxu0
        %v1194 = vadd.f32 0.0, %v1193
        %1195 = vdwg.mxu0
        %1196 = vmatpush.xpose.msra.mxu0 %v1106
        %1197 = vmatpush.xpose.msra.mxu0 %v1103
        %1198 = vmatpush.xpose.msra.mxu0 %v1100
        %1199 = vmatpush.xpose.msra.mxu0 %v1097
        %1200 = vmatpush.xpose.msra.mxu0 %v1094
        %1201 = vmatpush.xpose.msra.mxu0 %v1091
        %1202 = vmatpush.xpose.msra.mxu0 %v1088
        %1203 = vmatpush.xpose.msra.mxu0 %v1085
        %1204 = vmatpush.xpose.msra.mxu0 %v1082
        %1205 = vmatpush.xpose.msra.mxu0 %v1079
        %1206 = vmatpush.xpose.msra.mxu0 %v1076
        %1207 = vmatpush.xpose.msra.mxu0 %v1073
        %1208 = vmatpush.xpose.msra.mxu0 %v1070
        %1209 = vmatpush.xpose.msra.mxu0 %v1067
        %1210 = vmatpush.xpose.msra.mxu0 %v1064
        %1211 = vmatpush.xpose.msra.mxu0 %v1061
        %1212 = vmatmul.f32.gmra.mxu0 %v962
        %v1213 = vpop.f32.mrf.mxu0
        %v1214 = vadd.f32 0.0, %v1213
        %1215 = vdwg.mxu0
        %1216 = vmatpush.xpose.msra.mxu0 %v1154
        %1217 = vmatpush.xpose.msra.mxu0 %v1151
        %1218 = vmatpush.xpose.msra.mxu0 %v1148
        %1219 = vmatpush.xpose.msra.mxu0 %v1145
        %1220 = vmatpush.xpose.msra.mxu0 %v1142
        %1221 = vmatpush.xpose.msra.mxu0 %v1139
        %1222 = vmatpush.xpose.msra.mxu0 %v1136
        %1223 = vmatpush.xpose.msra.mxu0 %v1133
        %1224 = vmatpush.xpose.msra.mxu0 %v1130
        %1225 = vmatpush.xpose.msra.mxu0 %v1127
        %1226 = vmatpush.xpose.msra.mxu0 %v1124
        %1227 = vmatpush.xpose.msra.mxu0 %v1121
        %1228 = vmatpush.xpose.msra.mxu0 %v1118
        %1229 = vmatpush.xpose.msra.mxu0 %v1115
        %1230 = vmatpush.xpose.msra.mxu0 %v1112
        %1231 = vmatpush.xpose.msra.mxu0 %v1109
        %1232 = vmatmul.f32.gmra.mxu0 %v962
        %v1233 = vpop.f32.mrf.mxu0
        %v1234 = vadd.f32 0.0, %v1233
        %1235 = vdwg.mxu0
        %v1236 = vmul.f32 %v1174, 1.442695
        %v1237 = vpow.pop %v1236
        %v1238 = vmul.f32 %v1194, 1.442695
        %v1239 = vpow.pop %v1238
        %v1240 = vmul.f32 %v1214, 1.442695
        %v1241 = vpow.pop %v1240
        %v1242 = vmul.f32 %v1234, 1.442695
        %v1243 = vpow.pop %v1242
        %v1244 = vadd.f32 %v1237, 1.0
        %v1245 = vadd.f32 %v1239, 1.0
        %v1246 = vadd.f32 %v1241, 1.0
        %v1247 = vadd.f32 %v1243, 1.0
        %v1248 = vrcp.pop %v1244
        %v1249 = vmul.f32 %v1244, %v1248
        %v1250 = vsub.f32 1.0, %v1249
        %v1251 = vmul.f32 %v1248, %v1250
        %v1252 = vadd.f32 %v1248, %v1251
        %vm1253 = vweird.f32 %v1244
        %vm1254 = vweird.f32 %v1248
        %vm1255 = vmor %vm1253, %vm1254
        %v1256 = vsel %vm1255, %v1248, %v1252
        %v1257 = vand.u32 2147483647, %v1244
        %vm1258 = vcmp.eq.f32.partialorder %v1257, 8.507059e+37
        %v1259 = vand.u32 %v1244, 2147483648
        %v1260 = vor.u32 1.1754944e-38, %v1259
        %v1261 = vsel %vm1258, %v1260, %v1256
        %v1262 = vmul.f32 1.0, %v1261
        %v1263 = vrcp.pop %v1245
        %v1264 = vmul.f32 %v1245, %v1263
        %v1265 = vsub.f32 1.0, %v1264
        %v1266 = vmul.f32 %v1263, %v1265
        %v1267 = vadd.f32 %v1263, %v1266
        %vm1268 = vweird.f32 %v1245
        %vm1269 = vweird.f32 %v1263
        %vm1270 = vmor %vm1268, %vm1269
        %v1271 = vsel %vm1270, %v1263, %v1267
        %v1272 = vand.u32 2147483647, %v1245
        %vm1273 = vcmp.eq.f32.partialorder %v1272, 8.507059e+37
        %v1274 = vand.u32 %v1245, 2147483648
        %v1275 = vor.u32 1.1754944e-38, %v1274
        %v1276 = vsel %vm1273, %v1275, %v1271
        %v1277 = vmul.f32 1.0, %v1276
        %v1278 = vrcp.pop %v1246
        %v1279 = vmul.f32 %v1246, %v1278
        %v1280 = vsub.f32 1.0, %v1279
        %v1281 = vmul.f32 %v1278, %v1280
        %v1282 = vadd.f32 %v1278, %v1281
        %vm1283 = vweird.f32 %v1246
        %vm1284 = vweird.f32 %v1278
        %vm1285 = vmor %vm1283, %vm1284
        %v1286 = vsel %vm1285, %v1278, %v1282
        %v1287 = vand.u32 2147483647, %v1246
        %vm1288 = vcmp.eq.f32.partialorder %v1287, 8.507059e+37
        %v1289 = vand.u32 %v1246, 2147483648
        %v1290 = vor.u32 1.1754944e-38, %v1289
        %v1291 = vsel %vm1288, %v1290, %v1286
        %v1292 = vmul.f32 1.0, %v1291
        %v1293 = vrcp.pop %v1247
        %v1294 = vmul.f32 %v1247, %v1293
        %v1295 = vsub.f32 1.0, %v1294
        %v1296 = vmul.f32 %v1293, %v1295
        %v1297 = vadd.f32 %v1293, %v1296
        %vm1298 = vweird.f32 %v1247
        %vm1299 = vweird.f32 %v1293
        %vm1300 = vmor %vm1298, %vm1299
        %v1301 = vsel %vm1300, %v1293, %v1297
        %v1302 = vand.u32 2147483647, %v1247
        %vm1303 = vcmp.eq.f32.partialorder %v1302, 8.507059e+37
        %v1304 = vand.u32 %v1247, 2147483648
        %v1305 = vor.u32 1.1754944e-38, %v1304
        %v1306 = vsel %vm1303, %v1305, %v1301
        %v1307 = vmul.f32 1.0, %v1306
        %v1308 = vperm.slane %v1262, 0
        %v1309 = vlaneseq
        %v1310 = vshrl.u32 %v1309, 7
        %1312 = vset.pattern.permute.xlu0 %v1310
        %1313 = vperm.xlu0 %1312, %v1308
        %v1314 = vpop.permute.xlu0 %1313
        %v1315 = vlaneseq
        %v1316 = vshrl.u32 %v1315, 7
        %v1317 = vadd.s32 %v1316, 8
        %1318 = vset.pattern.permute.xlu0 %v1317
        %1319 = vperm.xlu0 %1318, %v1308
        %v1320 = vpop.permute.xlu0 %1319
        %v1321 = vlaneseq
        %v1322 = vshrl.u32 %v1321, 7
        %v1323 = vadd.s32 %v1322, 16
        %1324 = vset.pattern.permute.xlu0 %v1323
        %1325 = vperm.xlu0 %1324, %v1308
        %v1326 = vpop.permute.xlu0 %1325
        %v1327 = vlaneseq
        %v1328 = vshrl.u32 %v1327, 7
        %v1329 = vadd.s32 %v1328, 24
        %1330 = vset.pattern.permute.xlu0 %v1329
        %1331 = vperm.xlu0 %1330, %v1308
        %v1332 = vpop.permute.xlu0 %1331
        %v1333 = vlaneseq
        %v1334 = vshrl.u32 %v1333, 7
        %v1335 = vadd.s32 %v1334, 32
        %1336 = vset.pattern.permute.xlu0 %v1335
        %1337 = vperm.xlu0 %1336, %v1308
        %v1338 = vpop.permute.xlu0 %1337
        %v1339 = vlaneseq
        %v1340 = vshrl.u32 %v1339, 7
        %v1341 = vadd.s32 %v1340, 40
        %1342 = vset.pattern.permute.xlu0 %v1341
        %1343 = vperm.xlu0 %1342, %v1308
        %v1344 = vpop.permute.xlu0 %1343
        %v1345 = vlaneseq
        %v1346 = vshrl.u32 %v1345, 7
        %v1347 = vadd.s32 %v1346, 48
        %1348 = vset.pattern.permute.xlu0 %v1347
        %1349 = vperm.xlu0 %1348, %v1308
        %v1350 = vpop.permute.xlu0 %1349
        %v1351 = vlaneseq
        %v1352 = vshrl.u32 %v1351, 7
        %v1353 = vadd.s32 %v1352, 56
        %1354 = vset.pattern.permute.xlu0 %v1353
        %1355 = vperm.xlu0 %1354, %v1308
        %v1356 = vpop.permute.xlu0 %1355
        %v1357 = vlaneseq
        %v1358 = vshrl.u32 %v1357, 7
        %v1359 = vadd.s32 %v1358, 64
        %1360 = vset.pattern.permute.xlu0 %v1359
        %1361 = vperm.xlu0 %1360, %v1308
        %v1362 = vpop.permute.xlu0 %1361
        %v1363 = vlaneseq
        %v1364 = vshrl.u32 %v1363, 7
        %v1365 = vadd.s32 %v1364, 72
        %1366 = vset.pattern.permute.xlu0 %v1365
        %1367 = vperm.xlu0 %1366, %v1308
        %v1368 = vpop.permute.xlu0 %1367
        %v1369 = vlaneseq
        %v1370 = vshrl.u32 %v1369, 7
        %v1371 = vadd.s32 %v1370, 80
        %1372 = vset.pattern.permute.xlu0 %v1371
        %1373 = vperm.xlu0 %1372, %v1308
        %v1374 = vpop.permute.xlu0 %1373
        %v1375 = vlaneseq
        %v1376 = vshrl.u32 %v1375, 7
        %v1377 = vadd.s32 %v1376, 88
        %1378 = vset.pattern.permute.xlu0 %v1377
        %1379 = vperm.xlu0 %1378, %v1308
        %v1380 = vpop.permute.xlu0 %1379
        %v1381 = vlaneseq
        %v1382 = vshrl.u32 %v1381, 7
        %v1383 = vadd.s32 %v1382, 96
        %1384 = vset.pattern.permute.xlu0 %v1383
        %1385 = vperm.xlu0 %1384, %v1308
        %v1386 = vpop.permute.xlu0 %1385
        %v1387 = vlaneseq
        %v1388 = vshrl.u32 %v1387, 7
        %v1389 = vadd.s32 %v1388, 104
        %1390 = vset.pattern.permute.xlu0 %v1389
        %1391 = vperm.xlu0 %1390, %v1308
        %v1392 = vpop.permute.xlu0 %1391
        %v1393 = vlaneseq
        %v1394 = vshrl.u32 %v1393, 7
        %v1395 = vadd.s32 %v1394, 112
        %1396 = vset.pattern.permute.xlu0 %v1395
        %1397 = vperm.xlu0 %1396, %v1308
        %v1398 = vpop.permute.xlu0 %1397
        %v1399 = vlaneseq
        %v1400 = vshrl.u32 %v1399, 7
        %v1401 = vadd.s32 %v1400, 120
        %1402 = vset.pattern.permute.xlu0 %v1401
        %1403 = vperm.xlu0 %1402, %v1308
        %v1404 = vpop.permute.xlu0 %1403
        %v1405 = vperm.slane %v1277, 0
        %v1406 = vlaneseq
        %v1407 = vshrl.u32 %v1406, 7
        %1409 = vset.pattern.permute.xlu0 %v1407
        %1410 = vperm.xlu0 %1409, %v1405
        %v1411 = vpop.permute.xlu0 %1410
        %v1412 = vlaneseq
        %v1413 = vshrl.u32 %v1412, 7
        %v1414 = vadd.s32 %v1413, 8
        %1415 = vset.pattern.permute.xlu0 %v1414
        %1416 = vperm.xlu0 %1415, %v1405
        %v1417 = vpop.permute.xlu0 %1416
        %v1418 = vlaneseq
        %v1419 = vshrl.u32 %v1418, 7
        %v1420 = vadd.s32 %v1419, 16
        %1421 = vset.pattern.permute.xlu0 %v1420
        %1422 = vperm.xlu0 %1421, %v1405
        %v1423 = vpop.permute.xlu0 %1422
        %v1424 = vlaneseq
        %v1425 = vshrl.u32 %v1424, 7
        %v1426 = vadd.s32 %v1425, 24
        %1427 = vset.pattern.permute.xlu0 %v1426
        %1428 = vperm.xlu0 %1427, %v1405
        %v1429 = vpop.permute.xlu0 %1428
        %v1430 = vlaneseq
        %v1431 = vshrl.u32 %v1430, 7
        %v1432 = vadd.s32 %v1431, 32
        %1433 = vset.pattern.permute.xlu0 %v1432
        %1434 = vperm.xlu0 %1433, %v1405
        %v1435 = vpop.permute.xlu0 %1434
        %v1436 = vlaneseq
        %v1437 = vshrl.u32 %v1436, 7
        %v1438 = vadd.s32 %v1437, 40
        %1439 = vset.pattern.permute.xlu0 %v1438
        %1440 = vperm.xlu0 %1439, %v1405
        %v1441 = vpop.permute.xlu0 %1440
        %v1442 = vlaneseq
        %v1443 = vshrl.u32 %v1442, 7
        %v1444 = vadd.s32 %v1443, 48
        %1445 = vset.pattern.permute.xlu0 %v1444
        %1446 = vperm.xlu0 %1445, %v1405
        %v1447 = vpop.permute.xlu0 %1446
        %v1448 = vlaneseq
        %v1449 = vshrl.u32 %v1448, 7
        %v1450 = vadd.s32 %v1449, 56
        %1451 = vset.pattern.permute.xlu0 %v1450
        %1452 = vperm.xlu0 %1451, %v1405
        %v1453 = vpop.permute.xlu0 %1452
        %v1454 = vlaneseq
        %v1455 = vshrl.u32 %v1454, 7
        %v1456 = vadd.s32 %v1455, 64
        %1457 = vset.pattern.permute.xlu0 %v1456
        %1458 = vperm.xlu0 %1457, %v1405
        %v1459 = vpop.permute.xlu0 %1458
        %v1460 = vlaneseq
        %v1461 = vshrl.u32 %v1460, 7
        %v1462 = vadd.s32 %v1461, 72
        %1463 = vset.pattern.permute.xlu0 %v1462
        %1464 = vperm.xlu0 %1463, %v1405
        %v1465 = vpop.permute.xlu0 %1464
        %v1466 = vlaneseq
        %v1467 = vshrl.u32 %v1466, 7
        %v1468 = vadd.s32 %v1467, 80
        %1469 = vset.pattern.permute.xlu0 %v1468
        %1470 = vperm.xlu0 %1469, %v1405
        %v1471 = vpop.permute.xlu0 %1470
        %v1472 = vlaneseq
        %v1473 = vshrl.u32 %v1472, 7
        %v1474 = vadd.s32 %v1473, 88
        %1475 = vset.pattern.permute.xlu0 %v1474
        %1476 = vperm.xlu0 %1475, %v1405
        %v1477 = vpop.permute.xlu0 %1476
        %v1478 = vlaneseq
        %v1479 = vshrl.u32 %v1478, 7
        %v1480 = vadd.s32 %v1479, 96
        %1481 = vset.pattern.permute.xlu0 %v1480
        %1482 = vperm.xlu0 %1481, %v1405
        %v1483 = vpop.permute.xlu0 %1482
        %v1484 = vlaneseq
        %v1485 = vshrl.u32 %v1484, 7
        %v1486 = vadd.s32 %v1485, 104
        %1487 = vset.pattern.permute.xlu0 %v1486
        %1488 = vperm.xlu0 %1487, %v1405
        %v1489 = vpop.permute.xlu0 %1488
        %v1490 = vlaneseq
        %v1491 = vshrl.u32 %v1490, 7
        %v1492 = vadd.s32 %v1491, 112
        %1493 = vset.pattern.permute.xlu0 %v1492
        %1494 = vperm.xlu0 %1493, %v1405
        %v1495 = vpop.permute.xlu0 %1494
        %v1496 = vlaneseq
        %v1497 = vshrl.u32 %v1496, 7
        %v1498 = vadd.s32 %v1497, 120
        %1499 = vset.pattern.permute.xlu0 %v1498
        %1500 = vperm.xlu0 %1499, %v1405
        %v1501 = vpop.permute.xlu0 %1500
        %v1502 = vperm.slane %v1292, 0
        %v1503 = vlaneseq
        %v1504 = vshrl.u32 %v1503, 7
        %1506 = vset.pattern.permute.xlu0 %v1504
        %1507 = vperm.xlu0 %1506, %v1502
        %v1508 = vpop.permute.xlu0 %1507
        %v1509 = vlaneseq
        %v1510 = vshrl.u32 %v1509, 7
        %v1511 = vadd.s32 %v1510, 8
        %1512 = vset.pattern.permute.xlu0 %v1511
        %1513 = vperm.xlu0 %1512, %v1502
        %v1514 = vpop.permute.xlu0 %1513
        %v1515 = vlaneseq
        %v1516 = vshrl.u32 %v1515, 7
        %v1517 = vadd.s32 %v1516, 16
        %1518 = vset.pattern.permute.xlu0 %v1517
        %1519 = vperm.xlu0 %1518, %v1502
        %v1520 = vpop.permute.xlu0 %1519
        %v1521 = vlaneseq
        %v1522 = vshrl.u32 %v1521, 7
        %v1523 = vadd.s32 %v1522, 24
        %1524 = vset.pattern.permute.xlu0 %v1523
        %1525 = vperm.xlu0 %1524, %v1502
        %v1526 = vpop.permute.xlu0 %1525
        %v1527 = vlaneseq
        %v1528 = vshrl.u32 %v1527, 7
        %v1529 = vadd.s32 %v1528, 32
        %1530 = vset.pattern.permute.xlu0 %v1529
        %1531 = vperm.xlu0 %1530, %v1502
        %v1532 = vpop.permute.xlu0 %1531
        %v1533 = vlaneseq
        %v1534 = vshrl.u32 %v1533, 7
        %v1535 = vadd.s32 %v1534, 40
        %1536 = vset.pattern.permute.xlu0 %v1535
        %1537 = vperm.xlu0 %1536, %v1502
        %v1538 = vpop.permute.xlu0 %1537
        %v1539 = vlaneseq
        %v1540 = vshrl.u32 %v1539, 7
        %v1541 = vadd.s32 %v1540, 48
        %1542 = vset.pattern.permute.xlu0 %v1541
        %1543 = vperm.xlu0 %1542, %v1502
        %v1544 = vpop.permute.xlu0 %1543
        %v1545 = vlaneseq
        %v1546 = vshrl.u32 %v1545, 7
        %v1547 = vadd.s32 %v1546, 56
        %1548 = vset.pattern.permute.xlu0 %v1547
        %1549 = vperm.xlu0 %1548, %v1502
        %v1550 = vpop.permute.xlu0 %1549
        %v1551 = vlaneseq
        %v1552 = vshrl.u32 %v1551, 7
        %v1553 = vadd.s32 %v1552, 64
        %1554 = vset.pattern.permute.xlu0 %v1553
        %1555 = vperm.xlu0 %1554, %v1502
        %v1556 = vpop.permute.xlu0 %1555
        %v1557 = vlaneseq
        %v1558 = vshrl.u32 %v1557, 7
        %v1559 = vadd.s32 %v1558, 72
        %1560 = vset.pattern.permute.xlu0 %v1559
        %1561 = vperm.xlu0 %1560, %v1502
        %v1562 = vpop.permute.xlu0 %1561
        %v1563 = vlaneseq
        %v1564 = vshrl.u32 %v1563, 7
        %v1565 = vadd.s32 %v1564, 80
        %1566 = vset.pattern.permute.xlu0 %v1565
        %1567 = vperm.xlu0 %1566, %v1502
        %v1568 = vpop.permute.xlu0 %1567
        %v1569 = vlaneseq
        %v1570 = vshrl.u32 %v1569, 7
        %v1571 = vadd.s32 %v1570, 88
        %1572 = vset.pattern.permute.xlu0 %v1571
        %1573 = vperm.xlu0 %1572, %v1502
        %v1574 = vpop.permute.xlu0 %1573
        %v1575 = vlaneseq
        %v1576 = vshrl.u32 %v1575, 7
        %v1577 = vadd.s32 %v1576, 96
        %1578 = vset.pattern.permute.xlu0 %v1577
        %1579 = vperm.xlu0 %1578, %v1502
        %v1580 = vpop.permute.xlu0 %1579
        %v1581 = vlaneseq
        %v1582 = vshrl.u32 %v1581, 7
        %v1583 = vadd.s32 %v1582, 104
        %1584 = vset.pattern.permute.xlu0 %v1583
        %1585 = vperm.xlu0 %1584, %v1502
        %v1586 = vpop.permute.xlu0 %1585
        %v1587 = vlaneseq
        %v1588 = vshrl.u32 %v1587, 7
        %v1589 = vadd.s32 %v1588, 112
        %1590 = vset.pattern.permute.xlu0 %v1589
        %1591 = vperm.xlu0 %1590, %v1502
        %v1592 = vpop.permute.xlu0 %1591
        %v1593 = vlaneseq
        %v1594 = vshrl.u32 %v1593, 7
        %v1595 = vadd.s32 %v1594, 120
        %1596 = vset.pattern.permute.xlu0 %v1595
        %1597 = vperm.xlu0 %1596, %v1502
        %v1598 = vpop.permute.xlu0 %1597
        %v1599 = vperm.slane %v1307, 0
        %v1600 = vlaneseq
        %v1601 = vshrl.u32 %v1600, 7
        %1603 = vset.pattern.permute.xlu0 %v1601
        %1604 = vperm.xlu0 %1603, %v1599
        %v1605 = vpop.permute.xlu0 %1604
        %v1606 = vlaneseq
        %v1607 = vshrl.u32 %v1606, 7
        %v1608 = vadd.s32 %v1607, 8
        %1609 = vset.pattern.permute.xlu0 %v1608
        %1610 = vperm.xlu0 %1609, %v1599
        %v1611 = vpop.permute.xlu0 %1610
        %v1612 = vlaneseq
        %v1613 = vshrl.u32 %v1612, 7
        %v1614 = vadd.s32 %v1613, 16
        %1615 = vset.pattern.permute.xlu0 %v1614
        %1616 = vperm.xlu0 %1615, %v1599
        %v1617 = vpop.permute.xlu0 %1616
        %v1618 = vlaneseq
        %v1619 = vshrl.u32 %v1618, 7
        %v1620 = vadd.s32 %v1619, 24
        %1621 = vset.pattern.permute.xlu0 %v1620
        %1622 = vperm.xlu0 %1621, %v1599
        %v1623 = vpop.permute.xlu0 %1622
        %v1624 = vlaneseq
        %v1625 = vshrl.u32 %v1624, 7
        %v1626 = vadd.s32 %v1625, 32
        %1627 = vset.pattern.permute.xlu0 %v1626
        %1628 = vperm.xlu0 %1627, %v1599
        %v1629 = vpop.permute.xlu0 %1628
        %v1630 = vlaneseq
        %v1631 = vshrl.u32 %v1630, 7
        %v1632 = vadd.s32 %v1631, 40
        %1633 = vset.pattern.permute.xlu0 %v1632
        %1634 = vperm.xlu0 %1633, %v1599
        %v1635 = vpop.permute.xlu0 %1634
        %v1636 = vlaneseq
        %v1637 = vshrl.u32 %v1636, 7
        %v1638 = vadd.s32 %v1637, 48
        %1639 = vset.pattern.permute.xlu0 %v1638
        %1640 = vperm.xlu0 %1639, %v1599
        %v1641 = vpop.permute.xlu0 %1640
        %v1642 = vlaneseq
        %v1643 = vshrl.u32 %v1642, 7
        %v1644 = vadd.s32 %v1643, 56
        %1645 = vset.pattern.permute.xlu0 %v1644
        %1646 = vperm.xlu0 %1645, %v1599
        %v1647 = vpop.permute.xlu0 %1646
        %v1648 = vlaneseq
        %v1649 = vshrl.u32 %v1648, 7
        %v1650 = vadd.s32 %v1649, 64
        %1651 = vset.pattern.permute.xlu0 %v1650
        %1652 = vperm.xlu0 %1651, %v1599
        %v1653 = vpop.permute.xlu0 %1652
        %v1654 = vlaneseq
        %v1655 = vshrl.u32 %v1654, 7
        %v1656 = vadd.s32 %v1655, 72
        %1657 = vset.pattern.permute.xlu0 %v1656
        %1658 = vperm.xlu0 %1657, %v1599
        %v1659 = vpop.permute.xlu0 %1658
        %v1660 = vlaneseq
        %v1661 = vshrl.u32 %v1660, 7
        %v1662 = vadd.s32 %v1661, 80
        %1663 = vset.pattern.permute.xlu0 %v1662
        %1664 = vperm.xlu0 %1663, %v1599
        %v1665 = vpop.permute.xlu0 %1664
        %v1666 = vlaneseq
        %v1667 = vshrl.u32 %v1666, 7
        %v1668 = vadd.s32 %v1667, 88
        %1669 = vset.pattern.permute.xlu0 %v1668
        %1670 = vperm.xlu0 %1669, %v1599
        %v1671 = vpop.permute.xlu0 %1670
        %v1672 = vlaneseq
        %v1673 = vshrl.u32 %v1672, 7
        %v1674 = vadd.s32 %v1673, 96
        %1675 = vset.pattern.permute.xlu0 %v1674
        %1676 = vperm.xlu0 %1675, %v1599
        %v1677 = vpop.permute.xlu0 %1676
        %v1678 = vlaneseq
        %v1679 = vshrl.u32 %v1678, 7
        %v1680 = vadd.s32 %v1679, 104
        %1681 = vset.pattern.permute.xlu0 %v1680
        %1682 = vperm.xlu0 %1681, %v1599
        %v1683 = vpop.permute.xlu0 %1682
        %v1684 = vlaneseq
        %v1685 = vshrl.u32 %v1684, 7
        %v1686 = vadd.s32 %v1685, 112
        %1687 = vset.pattern.permute.xlu0 %v1686
        %1688 = vperm.xlu0 %1687, %v1599
        %v1689 = vpop.permute.xlu0 %1688
        %v1690 = vlaneseq
        %v1691 = vshrl.u32 %v1690, 7
        %v1692 = vadd.s32 %v1691, 120
        %1693 = vset.pattern.permute.xlu0 %v1692
        %1694 = vperm.xlu0 %1693, %v1599
        %v1695 = vpop.permute.xlu0 %1694
        %v1696 = vmul.f32 %v191, %v1314
        %v1697 = vmul.f32 %v192, %v1314
        %v1698 = vmul.f32 %v193, %v1320
        %v1699 = vmul.f32 %v194, %v1320
        %v1700 = vmul.f32 %v195, %v1326
        %v1701 = vmul.f32 %v196, %v1326
        %v1702 = vmul.f32 %v197, %v1332
        %v1703 = vmul.f32 %v198, %v1332
        %v1704 = vmul.f32 %v199, %v1338
        %v1705 = vmul.f32 %v200, %v1338
        %v1706 = vmul.f32 %v201, %v1344
        %v1707 = vmul.f32 %v202, %v1344
        %v1708 = vmul.f32 %v203, %v1350
        %v1709 = vmul.f32 %v204, %v1350
        %v1710 = vmul.f32 %v205, %v1356
        %v1711 = vmul.f32 %v206, %v1356
        %v1712 = vmul.f32 %v207, %v1362
        %v1713 = vmul.f32 %v208, %v1362
        %v1714 = vmul.f32 %v209, %v1368
        %v1715 = vmul.f32 %v210, %v1368
        %v1716 = vmul.f32 %v211, %v1374
        %v1717 = vmul.f32 %v212, %v1374
        %v1718 = vmul.f32 %v213, %v1380
        %v1719 = vmul.f32 %v214, %v1380
        %v1720 = vmul.f32 %v215, %v1386
        %v1721 = vmul.f32 %v216, %v1386
        %v1722 = vmul.f32 %v217, %v1392
        %v1723 = vmul.f32 %v218, %v1392
        %v1724 = vmul.f32 %v219, %v1398
        %v1725 = vmul.f32 %v220, %v1398
        %v1726 = vmul.f32 %v221, %v1404
        %v1727 = vmul.f32 %v222, %v1404
        %v1728 = vmul.f32 %v223, %v1411
        %v1729 = vmul.f32 %v224, %v1411
        %v1730 = vmul.f32 %v225, %v1417
        %v1731 = vmul.f32 %v226, %v1417
        %v1732 = vmul.f32 %v227, %v1423
        %v1733 = vmul.f32 %v228, %v1423
        %v1734 = vmul.f32 %v229, %v1429
        %v1735 = vmul.f32 %v230, %v1429
        %v1736 = vmul.f32 %v231, %v1435
        %v1737 = vmul.f32 %v232, %v1435
        %v1738 = vmul.f32 %v233, %v1441
        %v1739 = vmul.f32 %v234, %v1441
        %v1740 = vmul.f32 %v235, %v1447
        %v1741 = vmul.f32 %v236, %v1447
        %v1742 = vmul.f32 %v237, %v1453
        %v1743 = vmul.f32 %v238, %v1453
        %v1744 = vmul.f32 %v239, %v1459
        %v1745 = vmul.f32 %v240, %v1459
        %v1746 = vmul.f32 %v241, %v1465
        %v1747 = vmul.f32 %v242, %v1465
        %v1748 = vmul.f32 %v243, %v1471
        %v1749 = vmul.f32 %v244, %v1471
        %v1750 = vmul.f32 %v245, %v1477
        %v1751 = vmul.f32 %v246, %v1477
        %v1752 = vmul.f32 %v247, %v1483
        %v1753 = vmul.f32 %v248, %v1483
        %v1754 = vmul.f32 %v249, %v1489
        %v1755 = vmul.f32 %v250, %v1489
        %v1756 = vmul.f32 %v251, %v1495
        %v1757 = vmul.f32 %v252, %v1495
        %v1758 = vmul.f32 %v253, %v1501
        %v1759 = vmul.f32 %v254, %v1501
        %v1760 = vmul.f32 %v255, %v1508
        %v1761 = vmul.f32 %v256, %v1508
        %v1762 = vmul.f32 %v257, %v1514
        %v1763 = vmul.f32 %v258, %v1514
        %v1764 = vmul.f32 %v259, %v1520
        %v1765 = vmul.f32 %v260, %v1520
        %v1766 = vmul.f32 %v261, %v1526
        %v1767 = vmul.f32 %v262, %v1526
        %v1768 = vmul.f32 %v263, %v1532
        %v1769 = vmul.f32 %v264, %v1532
        %v1770 = vmul.f32 %v265, %v1538
        %v1771 = vmul.f32 %v266, %v1538
        %v1772 = vmul.f32 %v267, %v1544
        %v1773 = vmul.f32 %v268, %v1544
        %v1774 = vmul.f32 %v269, %v1550
        %v1775 = vmul.f32 %v270, %v1550
        %v1776 = vmul.f32 %v271, %v1556
        %v1777 = vmul.f32 %v272, %v1556
        %v1778 = vmul.f32 %v273, %v1562
        %v1779 = vmul.f32 %v274, %v1562
        %v1780 = vmul.f32 %v275, %v1568
        %v1781 = vmul.f32 %v276, %v1568
        %v1782 = vmul.f32 %v277, %v1574
        %v1783 = vmul.f32 %v278, %v1574
        %v1784 = vmul.f32 %v279, %v1580
        %v1785 = vmul.f32 %v280, %v1580
        %v1786 = vmul.f32 %v281, %v1586
        %v1787 = vmul.f32 %v282, %v1586
        %v1788 = vmul.f32 %v283, %v1592
        %v1789 = vmul.f32 %v284, %v1592
        %v1790 = vmul.f32 %v285, %v1598
        %v1791 = vmul.f32 %v286, %v1598
        %v1792 = vmul.f32 %v287, %v1605
        %v1793 = vmul.f32 %v288, %v1605
        %v1794 = vmul.f32 %v289, %v1611
        %v1795 = vmul.f32 %v290, %v1611
        %v1796 = vmul.f32 %v291, %v1617
        %v1797 = vmul.f32 %v292, %v1617
        %v1798 = vmul.f32 %v293, %v1623
        %v1799 = vmul.f32 %v294, %v1623
        %v1800 = vmul.f32 %v295, %v1629
        %v1801 = vmul.f32 %v296, %v1629
        %v1802 = vmul.f32 %v297, %v1635
        %v1803 = vmul.f32 %v298, %v1635
        %v1804 = vmul.f32 %v299, %v1641
        %v1805 = vmul.f32 %v300, %v1641
        %v1806 = vmul.f32 %v301, %v1647
        %v1807 = vmul.f32 %v302, %v1647
        %v1808 = vmul.f32 %v303, %v1653
        %v1809 = vmul.f32 %v304, %v1653
        %v1810 = vmul.f32 %v305, %v1659
        %v1811 = vmul.f32 %v306, %v1659
        %v1812 = vmul.f32 %v307, %v1665
        %v1813 = vmul.f32 %v308, %v1665
        %v1814 = vmul.f32 %v309, %v1671
        %v1815 = vmul.f32 %v310, %v1671
        %v1816 = vmul.f32 %v311, %v1677
        %v1817 = vmul.f32 %v312, %v1677
        %v1818 = vmul.f32 %v313, %v1683
        %v1819 = vmul.f32 %v314, %v1683
        %v1820 = vmul.f32 %v315, %v1689
        %v1821 = vmul.f32 %v316, %v1689
        %v1822 = vmul.f32 %v317, %v1695
        %v1823 = vmul.f32 %v318, %v1695
        %1824 = vst [vmem:[%s190] sm:$0xff] %v1696
        %1825 = vst [vmem:[%s190 + $0x8] sm:$0xff] %v1697
        %1826 = vst [vmem:[%s190 + $0x10] sm:$0xff] %v1698
        %1827 = vst [vmem:[%s190 + $0x18] sm:$0xff] %v1699
        %1828 = vst [vmem:[%s190 + $0x20] sm:$0xff] %v1700
        %1829 = vst [vmem:[%s190 + $0x28] sm:$0xff] %v1701
        %1830 = vst [vmem:[%s190 + $0x30] sm:$0xff] %v1702
        %1831 = vst [vmem:[%s190 + $0x38] sm:$0xff] %v1703
        %1832 = vst [vmem:[%s190 + $0x40] sm:$0xff] %v1704
        %1833 = vst [vmem:[%s190 + $0x48] sm:$0xff] %v1705
        %1834 = vst [vmem:[%s190 + $0x50] sm:$0xff] %v1706
        %1835 = vst [vmem:[%s190 + $0x58] sm:$0xff] %v1707
        %1836 = vst [vmem:[%s190 + $0x60] sm:$0xff] %v1708
        %1837 = vst [vmem:[%s190 + $0x68] sm:$0xff] %v1709
        %1838 = vst [vmem:[%s190 + $0x70] sm:$0xff] %v1710
        %1839 = vst [vmem:[%s190 + $0x78] sm:$0xff] %v1711
        %1840 = vst [vmem:[%s190 + $0x80] sm:$0xff] %v1712
        %1841 = vst [vmem:[%s190 + $0x88] sm:$0xff] %v1713
        %1842 = vst [vmem:[%s190 + $0x90] sm:$0xff] %v1714
        %1843 = vst [vmem:[%s190 + $0x98] sm:$0xff] %v1715
        %1844 = vst [vmem:[%s190 + $0xa0] sm:$0xff] %v1716
        %1845 = vst [vmem:[%s190 + $0xa8] sm:$0xff] %v1717
        %1846 = vst [vmem:[%s190 + $0xb0] sm:$0xff] %v1718
        %1847 = vst [vmem:[%s190 + $0xb8] sm:$0xff] %v1719
        %1848 = vst [vmem:[%s190 + $0xc0] sm:$0xff] %v1720
        %1849 = vst [vmem:[%s190 + $0xc8] sm:$0xff] %v1721
        %1850 = vst [vmem:[%s190 + $0xd0] sm:$0xff] %v1722
        %1851 = vst [vmem:[%s190 + $0xd8] sm:$0xff] %v1723
        %1852 = vst [vmem:[%s190 + $0xe0] sm:$0xff] %v1724
        %1853 = vst [vmem:[%s190 + $0xe8] sm:$0xff] %v1725
        %1854 = vst [vmem:[%s190 + $0xf0] sm:$0xff] %v1726
        %1855 = vst [vmem:[%s190 + $0xf8] sm:$0xff] %v1727
        %1856 = vst [vmem:[%s190 + $0x100] sm:$0xff] %v1728
        %1857 = vst [vmem:[%s190 + $0x108] sm:$0xff] %v1729
        %1858 = vst [vmem:[%s190 + $0x110] sm:$0xff] %v1730
        %1859 = vst [vmem:[%s190 + $0x118] sm:$0xff] %v1731
        %1860 = vst [vmem:[%s190 + $0x120] sm:$0xff] %v1732
        %1861 = vst [vmem:[%s190 + $0x128] sm:$0xff] %v1733
        %1862 = vst [vmem:[%s190 + $0x130] sm:$0xff] %v1734
        %1863 = vst [vmem:[%s190 + $0x138] sm:$0xff] %v1735
        %1864 = vst [vmem:[%s190 + $0x140] sm:$0xff] %v1736
        %1865 = vst [vmem:[%s190 + $0x148] sm:$0xff] %v1737
        %1866 = vst [vmem:[%s190 + $0x150] sm:$0xff] %v1738
        %1867 = vst [vmem:[%s190 + $0x158] sm:$0xff] %v1739
        %1868 = vst [vmem:[%s190 + $0x160] sm:$0xff] %v1740
        %1869 = vst [vmem:[%s190 + $0x168] sm:$0xff] %v1741
        %1870 = vst [vmem:[%s190 + $0x170] sm:$0xff] %v1742
        %1871 = vst [vmem:[%s190 + $0x178] sm:$0xff] %v1743
        %1872 = vst [vmem:[%s190 + $0x180] sm:$0xff] %v1744
        %1873 = vst [vmem:[%s190 + $0x188] sm:$0xff] %v1745
        %1874 = vst [vmem:[%s190 + $0x190] sm:$0xff] %v1746
        %1875 = vst [vmem:[%s190 + $0x198] sm:$0xff] %v1747
        %1876 = vst [vmem:[%s190 + $0x1a0] sm:$0xff] %v1748
        %1877 = vst [vmem:[%s190 + $0x1a8] sm:$0xff] %v1749
        %1878 = vst [vmem:[%s190 + $0x1b0] sm:$0xff] %v1750
        %1879 = vst [vmem:[%s190 + $0x1b8] sm:$0xff] %v1751
        %1880 = vst [vmem:[%s190 + $0x1c0] sm:$0xff] %v1752
        %1881 = vst [vmem:[%s190 + $0x1c8] sm:$0xff] %v1753
        %1882 = vst [vmem:[%s190 + $0x1d0] sm:$0xff] %v1754
        %1883 = vst [vmem:[%s190 + $0x1d8] sm:$0xff] %v1755
        %1884 = vst [vmem:[%s190 + $0x1e0] sm:$0xff] %v1756
        %1885 = vst [vmem:[%s190 + $0x1e8] sm:$0xff] %v1757
        %1886 = vst [vmem:[%s190 + $0x1f0] sm:$0xff] %v1758
        %1887 = vst [vmem:[%s190 + $0x1f8] sm:$0xff] %v1759
        %1888 = vst [vmem:[%s190 + $0x200] sm:$0xff] %v1760
        %1889 = vst [vmem:[%s190 + $0x208] sm:$0xff] %v1761
        %1890 = vst [vmem:[%s190 + $0x210] sm:$0xff] %v1762
        %1891 = vst [vmem:[%s190 + $0x218] sm:$0xff] %v1763
        %1892 = vst [vmem:[%s190 + $0x220] sm:$0xff] %v1764
        %1893 = vst [vmem:[%s190 + $0x228] sm:$0xff] %v1765
        %1894 = vst [vmem:[%s190 + $0x230] sm:$0xff] %v1766
        %1895 = vst [vmem:[%s190 + $0x238] sm:$0xff] %v1767
        %1896 = vst [vmem:[%s190 + $0x240] sm:$0xff] %v1768
        %1897 = vst [vmem:[%s190 + $0x248] sm:$0xff] %v1769
        %1898 = vst [vmem:[%s190 + $0x250] sm:$0xff] %v1770
        %1899 = vst [vmem:[%s190 + $0x258] sm:$0xff] %v1771
        %1900 = vst [vmem:[%s190 + $0x260] sm:$0xff] %v1772
        %1901 = vst [vmem:[%s190 + $0x268] sm:$0xff] %v1773
        %1902 = vst [vmem:[%s190 + $0x270] sm:$0xff] %v1774
        %1903 = vst [vmem:[%s190 + $0x278] sm:$0xff] %v1775
        %1904 = vst [vmem:[%s190 + $0x280] sm:$0xff] %v1776
        %1905 = vst [vmem:[%s190 + $0x288] sm:$0xff] %v1777
        %1906 = vst [vmem:[%s190 + $0x290] sm:$0xff] %v1778
        %1907 = vst [vmem:[%s190 + $0x298] sm:$0xff] %v1779
        %1908 = vst [vmem:[%s190 + $0x2a0] sm:$0xff] %v1780
        %1909 = vst [vmem:[%s190 + $0x2a8] sm:$0xff] %v1781
        %1910 = vst [vmem:[%s190 + $0x2b0] sm:$0xff] %v1782
        %1911 = vst [vmem:[%s190 + $0x2b8] sm:$0xff] %v1783
        %1912 = vst [vmem:[%s190 + $0x2c0] sm:$0xff] %v1784
        %1913 = vst [vmem:[%s190 + $0x2c8] sm:$0xff] %v1785
        %1914 = vst [vmem:[%s190 + $0x2d0] sm:$0xff] %v1786
        %1915 = vst [vmem:[%s190 + $0x2d8] sm:$0xff] %v1787
        %1916 = vst [vmem:[%s190 + $0x2e0] sm:$0xff] %v1788
        %1917 = vst [vmem:[%s190 + $0x2e8] sm:$0xff] %v1789
        %1918 = vst [vmem:[%s190 + $0x2f0] sm:$0xff] %v1790
        %1919 = vst [vmem:[%s190 + $0x2f8] sm:$0xff] %v1791
        %1920 = vst [vmem:[%s190 + $0x300] sm:$0xff] %v1792
        %1921 = vst [vmem:[%s190 + $0x308] sm:$0xff] %v1793
        %1922 = vst [vmem:[%s190 + $0x310] sm:$0xff] %v1794
        %1923 = vst [vmem:[%s190 + $0x318] sm:$0xff] %v1795
        %1924 = vst [vmem:[%s190 + $0x320] sm:$0xff] %v1796
        %1925 = vst [vmem:[%s190 + $0x328] sm:$0xff] %v1797
        %1926 = vst [vmem:[%s190 + $0x330] sm:$0xff] %v1798
        %1927 = vst [vmem:[%s190 + $0x338] sm:$0xff] %v1799
        %1928 = vst [vmem:[%s190 + $0x340] sm:$0xff] %v1800
        %1929 = vst [vmem:[%s190 + $0x348] sm:$0xff] %v1801
        %1930 = vst [vmem:[%s190 + $0x350] sm:$0xff] %v1802
        %1931 = vst [vmem:[%s190 + $0x358] sm:$0xff] %v1803
        %1932 = vst [vmem:[%s190 + $0x360] sm:$0xff] %v1804
        %1933 = vst [vmem:[%s190 + $0x368] sm:$0xff] %v1805
        %1934 = vst [vmem:[%s190 + $0x370] sm:$0xff] %v1806
        %1935 = vst [vmem:[%s190 + $0x378] sm:$0xff] %v1807
        %1936 = vst [vmem:[%s190 + $0x380] sm:$0xff] %v1808
        %1937 = vst [vmem:[%s190 + $0x388] sm:$0xff] %v1809
        %1938 = vst [vmem:[%s190 + $0x390] sm:$0xff] %v1810
        %1939 = vst [vmem:[%s190 + $0x398] sm:$0xff] %v1811
        %1940 = vst [vmem:[%s190 + $0x3a0] sm:$0xff] %v1812
        %1941 = vst [vmem:[%s190 + $0x3a8] sm:$0xff] %v1813
        %1942 = vst [vmem:[%s190 + $0x3b0] sm:$0xff] %v1814
        %1943 = vst [vmem:[%s190 + $0x3b8] sm:$0xff] %v1815
        %1944 = vst [vmem:[%s190 + $0x3c0] sm:$0xff] %v1816
        %1945 = vst [vmem:[%s190 + $0x3c8] sm:$0xff] %v1817
        %1946 = vst [vmem:[%s190 + $0x3d0] sm:$0xff] %v1818
        %1947 = vst [vmem:[%s190 + $0x3d8] sm:$0xff] %v1819
        %1948 = vst [vmem:[%s190 + $0x3e0] sm:$0xff] %v1820
        %1949 = vst [vmem:[%s190 + $0x3e8] sm:$0xff] %v1821
        %1950 = vst [vmem:[%s190 + $0x3f0] sm:$0xff] %v1822
        %1951 = vst [vmem:[%s190 + $0x3f8] sm:$0xff] %v1823
        %s1952 = sand.u32 %s96, 1
        %s1953 = scalar_lea.sflag [#allocation4], %s1952
        %s1954 = sand.u32 %s96, 1
        %s1955 = smul.addr %s1954, 1024
        %s1956 = scalar_lea.vmem [#allocation5], %s1955
        // Predicated region
        $region37: #{tpu_custom_call.1} parent=31 // pred_check
          %p1957 = pneg %p106
        $region38: #{tpu_custom_call.1} parent=31 // pred_check_branch
          %1959 = sbr.rel (%p1957) target = $region40
        $region39: #{tpu_custom_call.1} parent=31 // pred_region
          %1961 = vsyncadd %s1953, 0
          %s1962 = smul.addr %s20, 128
          %s1963 = smul.addr %s1962, 8
          %s1964 = scalar_lea.hbm %s3, %s1963
          %s1965 = sshll.u32 %s1956, 4
          %s1966 = int_to_ptr.vmem [resolvable:$true] %s1965
          %s1967 = sshll.u32 %s1964, 4
          %s1968 = int_to_ptr.hbm [resolvable:$true] %s1967
          %1973 = dma.vmem_to_hbm [thread:$0]  %s1966, 16384, %s1968, %s1953, 256, 256, 16
        $region40: #{tpu_custom_call.1} parent=31 // pred_fallthru
          _
      $region32: #{tpu_custom_call.1} parent=5 // pred_fallthru
        _
      %p1974 = scmp.le.s32.totalorder 2, %s15
      // Predicated region
      $region41: #{tpu_custom_call.1} parent=5 // pred_check
        %p1975 = pneg %p1974
      $region42: #{tpu_custom_call.1} parent=5 // pred_check_branch
        %1977 = sbr.rel (%p1975) target = $region44
      $region43: #{tpu_custom_call.1} parent=5 // pred_region
        %s1978 = ssub.s32 %s15, 2
        // Predicated region
        $region45: #{tpu_custom_call.1} parent=43 // pred_check
          %p1979 = pneg %p112
        $region46: #{tpu_custom_call.1} parent=43 // pred_check_branch
          %1981 = sbr.rel (%p1979) target = $region48
        $region47: #{tpu_custom_call.1} parent=43 // pred_region
          %s1982 = sand.u32 %s97, 1
          %s1983 = scalar_lea.sflag [#allocation4], %s1982
          %s1984 = sand.u32 %s97, 1
          %s1985 = smul.addr %s1984, 1024
          %s1986 = scalar_lea.vmem [#allocation5], %s1985
          %1988 = dma.done %s1983, 16384
        $region48: #{tpu_custom_call.1} parent=43 // pred_fallthru
          _
      $region44: #{tpu_custom_call.1} parent=5 // pred_fallthru
        _
    $region6: #{tpu_custom_call.1} parent=1 // loop_footer
      %s19 = sadd.s32 1, %s15
    $region7: #{tpu_custom_call.1} parent=1 // loop_footer_branch
      %14 = sbr.rel target = $region3
    $region8: #{tpu_custom_call.1} parent=1 // loop_exit
      _
    %1989 = vsyncpa [#allocation3], 1
    %s1990 = scalar_lea.sflag [#allocation3], 1
    %1991 = vsyncpa %s1990, 1
    %1992 = vsyncpa [#allocation4], 1
    %s1993 = scalar_lea.sflag [#allocation4], 1
    %1994 = vsyncpa %s1993, 1

</llo_original>
